<compile_context>
chip_gen: v7x
topology: tpu7x:2x2x1
jax: 0.10.0
libtpu: 0.0.40
codegen_flags: <defaults>
</compile_context>

<pallas_src>
import jax
import jax.numpy as jnp
from jax import lax
from jax.experimental import pallas as pl
from jax.experimental.pallas import tpu as pltpu


def encoder_kernel(idx_ref, emb_ref, w1_ref, b1_ref, w2_ref, b2_ref, out_ref):
    # idx_ref : VMEM (TB, S)  int32 token ids (0 = padding)
    # emb_ref : VMEM (Vp, Dp) f32 embedding table (resident: constant index_map)
    # w1_ref  : VMEM (Dp, Fp) f32     b1_ref : VMEM (1, Fp) f32
    # w2_ref  : VMEM (Fp, Op) f32     b2_ref : VMEM (1, Op) f32
    # out_ref : VMEM (TB, Op) f32
    TB, S = idx_ref.shape
    Vp = emb_ref.shape[0]

    ids = idx_ref[...]                                          # (TB, S) int32
    vocab = lax.broadcasted_iota(jnp.int32, (TB, Vp), 1)        # vocab id per lane

    # Bag-count matrix: counts[b, v] = #occurrences of token v in bag b.
    counts = jnp.zeros((TB, Vp), jnp.float32)
    for s in range(S):                                          # S is small & static
        tok = ids[:, s:s + 1]                                   # (TB, 1)
        counts = counts + (tok == vocab).astype(jnp.float32)
    # EmbeddingBag(padding_idx=0): exclude padding tokens from both sum and count.
    counts = jnp.where(vocab == 0, 0.0, counts)

    cnt = jnp.sum(counts, axis=-1, keepdims=True)               # (TB, 1) valid tokens
    inv = 1.0 / jnp.maximum(cnt, 1.0)                           # empty bag -> zeros

    # Mean pooling on the MXU: sum of gathered rows == counts @ emb, then scale.
    pooled = jnp.dot(counts, emb_ref[...],
                     preferred_element_type=jnp.float32) * inv  # (TB, Dp)

    # Linear -> ReLU -> Linear (f32 MXU matmuls, f32 accumulation).
    h = jnp.dot(pooled, w1_ref[...], preferred_element_type=jnp.float32) + b1_ref[...]
    h = jnp.maximum(h, 0.0)
    out = jnp.dot(h, w2_ref[...], preferred_element_type=jnp.float32) + b2_ref[...]
    out_ref[...] = out.astype(out_ref.dtype)


def _round_up(x, m):
    return (x + m - 1) // m * m


def simple_text_encoder(idx, emb, w1, b1, w2, b2, *, block_b=128):
    """idx: (B, S) int token bags (0 = padding).  emb: (V, D).
    w1: (D, fc), w2: (fc, out) are passed pre-transposed (in, out) so the kernel
    computes x @ W + b.  Biases may be (F,) or (1, F)."""
    B, S = idx.shape
    V, D = emb.shape
    F = w1.shape[1]
    O = w2.shape[1]

    # Lane-dense padding (zeros preserve the result); batch padded to a multiple
    # of the 128-row tile; padded bags are all-padding and sliced off afterwards.
    Dp, Fp, Op = _round_up(D, 128), _round_up(F, 128), _round_up(O, 128)
    Vp = _round_up(V, 128)
    Bp = _round_up(max(B, block_b), block_b)
    n_tiles = Bp // block_b
    if n_tiles > 1 and n_tiles % 2 == 1:       # keep v7x megacore split balanced
        n_tiles += 1
        Bp = n_tiles * block_b

    idx_p = jnp.zeros((Bp, S), jnp.int32).at[:B, :].set(idx.astype(jnp.int32))
    emb_p = jnp.zeros((Vp, Dp), jnp.float32).at[:V, :D].set(emb.astype(jnp.float32))
    w1_p = jnp.zeros((Dp, Fp), jnp.float32).at[:D, :F].set(w1.astype(jnp.float32))
    b1_p = jnp.zeros((1, Fp), jnp.float32).at[:, :F].set(
        jnp.reshape(b1, (1, F)).astype(jnp.float32))
    w2_p = jnp.zeros((Fp, Op), jnp.float32).at[:F, :O].set(w2.astype(jnp.float32))
    b2_p = jnp.zeros((1, Op), jnp.float32).at[:, :O].set(
        jnp.reshape(b2, (1, O)).astype(jnp.float32))

    grid = (n_tiles,)

    cost = pl.CostEstimate(
        flops=2 * Bp * (Vp * Dp + Dp * Fp + Fp * Op),
        transcendentals=0,
        bytes_accessed=(idx_p.size * 4 + emb_p.size * 4 + w1_p.size * 4
                        + w2_p.size * 4 + b1_p.size * 4 + b2_p.size * 4
                        + Bp * Op * 4),
    )

    grid_spec = pltpu.PrefetchScalarGridSpec(
        num_scalar_prefetch=0,
        grid=grid,
        in_specs=[
            pl.BlockSpec((block_b, S), lambda i: (i, 0)),   # token ids (per tile)
            pl.BlockSpec((Vp, Dp), lambda i: (0, 0)),       # emb  (resident)
            pl.BlockSpec((Dp, Fp), lambda i: (0, 0)),       # w1   (resident)
            pl.BlockSpec((1, Fp), lambda i: (0, 0)),        # b1
            pl.BlockSpec((Fp, Op), lambda i: (0, 0)),       # w2   (resident)
            pl.BlockSpec((1, Op), lambda i: (0, 0)),        # b2
        ],
        out_specs=pl.BlockSpec((block_b, Op), lambda i: (i, 0)),
        scratch_shapes=[],
    )

    out = pl.pallas_call(
        encoder_kernel,
        out_shape=jax.ShapeDtypeStruct((Bp, Op), jnp.float32),
        grid_spec=grid_spec,
        compiler_params=pltpu.CompilerParams(
            dimension_semantics=("parallel",),              # megacore over batch tiles
            vmem_limit_bytes=48 * 1024 * 1024,              # fits v7x, > default on v5e/v6e
        ),
        cost_estimate=cost,
    )(idx_p, emb_p, w1_p, b1_p, w2_p, b2_p)

    return out[:B, :O]


def reference(idx, emb, w1, b1, w2, b2):
    # Pure-JAX (f32) reference of the PyTorch forward.
    mask = (idx != 0).astype(jnp.float32)                     # padding_idx = 0
    gathered = emb[idx]                                       # (B, S, D)
    summed = jnp.sum(gathered * mask[..., None], axis=1)      # (B, D)
    counts = jnp.maximum(jnp.sum(mask, axis=1, keepdims=True), 1.0)
    pooled = summed / counts
    h = jnp.maximum(pooled @ w1 + jnp.reshape(b1, (1, -1)), 0.0)
    return h @ w2 + jnp.reshape(b2, (1, -1))


if __name__ == "__main__":
    # Module hyperparameters (small synthetic sizes).
    num_embeddings = 32    # V
    embedding_dim = 32     # D
    fc_dim = 32
    output_dim = 16
    B, S = 2, 8

    key = jax.random.PRNGKey(0)
    k_idx, k_emb, k_w1, k_b1, k_w2, k_b2 = jax.random.split(key, 6)

    # Token indices; index 0 acts as padding (some zeros may be present).
    idx = jax.random.randint(k_idx, (B, S), 0, num_embeddings, dtype=jnp.int32)

    # Deterministic parameter init (embedding row 0 zeroed, matching padding_idx).
    emb = jax.random.normal(k_emb, (num_embeddings, embedding_dim), jnp.float32) * 0.1
    emb = emb.at[0].set(0.0)
    w1 = jax.random.normal(k_w1, (embedding_dim, fc_dim), jnp.float32) * 0.1   # (in, out)
    b1 = jax.random.normal(k_b1, (1, fc_dim), jnp.float32) * 0.1
    w2 = jax.random.normal(k_w2, (fc_dim, output_dim), jnp.float32) * 0.1      # (in, out)
    b2 = jax.random.normal(k_b2, (1, output_dim), jnp.float32) * 0.1

    out = simple_text_encoder(idx, emb, w1, b1, w2, b2)
    out = jax.block_until_ready(out)

    ref = reference(idx, emb, w1, b1, w2, b2)
    assert out.shape == (B, output_dim)
    # All-f32 kernel (MXU f32 accumulation) => tight tolerance vs the f32 reference.
    assert jnp.allclose(out, ref, atol=1e-3, rtol=1e-3), "mismatch vs reference"

    print("KERNEL_OK")
</pallas_src>

<mosaic_0001>
module attributes {stable_mosaic.version = 11 : i64} {
  func.func @encoder_kernel(%arg0: i32, %arg1: memref<128x8xi32, #tpu.memory_space<vmem>>, %arg2: memref<128x128xf32, #tpu.memory_space<vmem>>, %arg3: memref<128x128xf32, #tpu.memory_space<vmem>>, %arg4: memref<1x128xf32, #tpu.memory_space<vmem>>, %arg5: memref<128x128xf32, #tpu.memory_space<vmem>>, %arg6: memref<1x128xf32, #tpu.memory_space<vmem>>, %arg7: memref<128x128xf32, #tpu.memory_space<vmem>>) attributes {dimension_semantics = [#tpu.dimension_semantics<parallel>], iteration_bounds = array<i64: 1>, scalar_prefetch = 0 : i64, scratch_operands = 0 : i64, tpu.core_type = #tpu.core_type<tc>, window_params = [{transform_indices = @transform_0, window_bounds = array<i64: 128, 8>}, {pipeline_mode = #tpu.pipeline_mode<synchronous>, transform_indices = @transform_1, window_bounds = array<i64: 128, 128>}, {pipeline_mode = #tpu.pipeline_mode<synchronous>, transform_indices = @transform_2, window_bounds = array<i64: 128, 128>}, {pipeline_mode = #tpu.pipeline_mode<synchronous>, transform_indices = @transform_3, window_bounds = array<i64: 1, 128>}, {pipeline_mode = #tpu.pipeline_mode<synchronous>, transform_indices = @transform_4, window_bounds = array<i64: 128, 128>}, {pipeline_mode = #tpu.pipeline_mode<synchronous>, transform_indices = @transform_5, window_bounds = array<i64: 1, 128>}, {transform_indices = @transform_6, window_bounds = array<i64: 128, 128>}]} {
    %c0 = arith.constant 0 : index
    %c0_0 = arith.constant 0 : index
    %0 = vector.load %arg1[%c0, %c0_0] : memref<128x8xi32, #tpu.memory_space<vmem>>, vector<128x8xi32>
    %1 = tpu.iota {dimensions = array<i32: 1>} : vector<128x128xi32>
    %cst = arith.constant 0.000000e+00 : f32
    %2 = vector.broadcast %cst : f32 to vector<128x128xf32>
    %3 = vector.extract_strided_slice %0 {offsets = [0, 0], sizes = [128, 1], strides = [1, 1]} : vector<128x8xi32> to vector<128x1xi32>
    %4 = vector.broadcast %3 : vector<128x1xi32> to vector<128x128xi32>
    %5 = arith.cmpi eq, %4, %1 : vector<128x128xi32>
    %6 = arith.extui %5 : vector<128x128xi1> to vector<128x128xi32>
    %7 = arith.sitofp %6 : vector<128x128xi32> to vector<128x128xf32>
    %8 = arith.addf %2, %7 : vector<128x128xf32>
    %9 = vector.extract_strided_slice %0 {offsets = [0, 1], sizes = [128, 1], strides = [1, 1]} : vector<128x8xi32> to vector<128x1xi32>
    %10 = vector.broadcast %9 : vector<128x1xi32> to vector<128x128xi32>
    %11 = arith.cmpi eq, %10, %1 : vector<128x128xi32>
    %12 = arith.extui %11 : vector<128x128xi1> to vector<128x128xi32>
    %13 = arith.sitofp %12 : vector<128x128xi32> to vector<128x128xf32>
    %14 = arith.addf %8, %13 : vector<128x128xf32>
    %15 = vector.extract_strided_slice %0 {offsets = [0, 2], sizes = [128, 1], strides = [1, 1]} : vector<128x8xi32> to vector<128x1xi32>
    %16 = vector.broadcast %15 : vector<128x1xi32> to vector<128x128xi32>
    %17 = arith.cmpi eq, %16, %1 : vector<128x128xi32>
    %18 = arith.extui %17 : vector<128x128xi1> to vector<128x128xi32>
    %19 = arith.sitofp %18 : vector<128x128xi32> to vector<128x128xf32>
    %20 = arith.addf %14, %19 : vector<128x128xf32>
    %21 = vector.extract_strided_slice %0 {offsets = [0, 3], sizes = [128, 1], strides = [1, 1]} : vector<128x8xi32> to vector<128x1xi32>
    %22 = vector.broadcast %21 : vector<128x1xi32> to vector<128x128xi32>
    %23 = arith.cmpi eq, %22, %1 : vector<128x128xi32>
    %24 = arith.extui %23 : vector<128x128xi1> to vector<128x128xi32>
    %25 = arith.sitofp %24 : vector<128x128xi32> to vector<128x128xf32>
    %26 = arith.addf %20, %25 : vector<128x128xf32>
    %27 = vector.extract_strided_slice %0 {offsets = [0, 4], sizes = [128, 1], strides = [1, 1]} : vector<128x8xi32> to vector<128x1xi32>
    %28 = vector.broadcast %27 : vector<128x1xi32> to vector<128x128xi32>
    %29 = arith.cmpi eq, %28, %1 : vector<128x128xi32>
    %30 = arith.extui %29 : vector<128x128xi1> to vector<128x128xi32>
    %31 = arith.sitofp %30 : vector<128x128xi32> to vector<128x128xf32>
    %32 = arith.addf %26, %31 : vector<128x128xf32>
    %33 = vector.extract_strided_slice %0 {offsets = [0, 5], sizes = [128, 1], strides = [1, 1]} : vector<128x8xi32> to vector<128x1xi32>
    %34 = vector.broadcast %33 : vector<128x1xi32> to vector<128x128xi32>
    %35 = arith.cmpi eq, %34, %1 : vector<128x128xi32>
    %36 = arith.extui %35 : vector<128x128xi1> to vector<128x128xi32>
    %37 = arith.sitofp %36 : vector<128x128xi32> to vector<128x128xf32>
    %38 = arith.addf %32, %37 : vector<128x128xf32>
    %39 = vector.extract_strided_slice %0 {offsets = [0, 6], sizes = [128, 1], strides = [1, 1]} : vector<128x8xi32> to vector<128x1xi32>
    %40 = vector.broadcast %39 : vector<128x1xi32> to vector<128x128xi32>
    %41 = arith.cmpi eq, %40, %1 : vector<128x128xi32>
    %42 = arith.extui %41 : vector<128x128xi1> to vector<128x128xi32>
    %43 = arith.sitofp %42 : vector<128x128xi32> to vector<128x128xf32>
    %44 = arith.addf %38, %43 : vector<128x128xf32>
    %45 = vector.extract_strided_slice %0 {offsets = [0, 7], sizes = [128, 1], strides = [1, 1]} : vector<128x8xi32> to vector<128x1xi32>
    %46 = vector.broadcast %45 : vector<128x1xi32> to vector<128x128xi32>
    %47 = arith.cmpi eq, %46, %1 : vector<128x128xi32>
    %48 = arith.extui %47 : vector<128x128xi1> to vector<128x128xi32>
    %49 = arith.sitofp %48 : vector<128x128xi32> to vector<128x128xf32>
    %50 = arith.addf %44, %49 : vector<128x128xf32>
    %c0_i32 = arith.constant 0 : i32
    %51 = vector.broadcast %c0_i32 : i32 to vector<128x128xi32>
    %52 = arith.cmpi eq, %1, %51 : vector<128x128xi32>
    %cst_1 = arith.constant 0.000000e+00 : f32
    %53 = vector.broadcast %cst_1 : f32 to vector<128x128xf32>
    %54 = arith.select %52, %53, %50 : vector<128x128xi1>, vector<128x128xf32>
    %cst_2 = arith.constant dense<0.000000e+00> : vector<128xf32>
    %55 = vector.multi_reduction <add>, %54, %cst_2 [1] : vector<128x128xf32> to vector<128xf32>
    %56 = vector.shape_cast %55 : vector<128xf32> to vector<128x1xf32>
    %cst_3 = arith.constant 1.000000e+00 : f32
    %57 = vector.broadcast %cst_3 : f32 to vector<128x1xf32>
    %58 = arith.maximumf %56, %57 : vector<128x1xf32>
    %cst_4 = arith.constant 1.000000e+00 : f32
    %59 = vector.broadcast %cst_4 : f32 to vector<128x1xf32>
    %60 = arith.divf %59, %58 : vector<128x1xf32>
    %c0_5 = arith.constant 0 : index
    %c0_6 = arith.constant 0 : index
    %61 = vector.load %arg2[%c0_5, %c0_6] : memref<128x128xf32, #tpu.memory_space<vmem>>, vector<128x128xf32>
    %cst_7 = arith.constant dense<0.000000e+00> : vector<128x128xf32>
    %62 = tpu.matmul %54, %61, %cst_7 {dimension_numbers = #tpu.dot_dimension_numbers<[1], [0], [0], [1], [0, 0, 1, 1], [], []>} : vector<128x128xf32>, vector<128x128xf32>, vector<128x128xf32> -> vector<128x128xf32>
    %63 = vector.broadcast %60 : vector<128x1xf32> to vector<128x128xf32>
    %64 = arith.mulf %62, %63 : vector<128x128xf32>
    %c0_8 = arith.constant 0 : index
    %c0_9 = arith.constant 0 : index
    %65 = vector.load %arg3[%c0_8, %c0_9] : memref<128x128xf32, #tpu.memory_space<vmem>>, vector<128x128xf32>
    %cst_10 = arith.constant dense<0.000000e+00> : vector<128x128xf32>
    %66 = tpu.matmul %64, %65, %cst_10 {dimension_numbers = #tpu.dot_dimension_numbers<[1], [0], [0], [1], [0, 0, 1, 1], [], []>} : vector<128x128xf32>, vector<128x128xf32>, vector<128x128xf32> -> vector<128x128xf32>
    %c0_11 = arith.constant 0 : index
    %c0_12 = arith.constant 0 : index
    %67 = vector.load %arg4[%c0_11, %c0_12] : memref<1x128xf32, #tpu.memory_space<vmem>>, vector<1x128xf32>
    %68 = vector.broadcast %67 : vector<1x128xf32> to vector<128x128xf32>
    %69 = arith.addf %66, %68 : vector<128x128xf32>
    %cst_13 = arith.constant 0.000000e+00 : f32
    %70 = vector.broadcast %cst_13 : f32 to vector<128x128xf32>
    %71 = arith.maximumf %69, %70 : vector<128x128xf32>
    %c0_14 = arith.constant 0 : index
    %c0_15 = arith.constant 0 : index
    %72 = vector.load %arg5[%c0_14, %c0_15] : memref<128x128xf32, #tpu.memory_space<vmem>>, vector<128x128xf32>
    %cst_16 = arith.constant dense<0.000000e+00> : vector<128x128xf32>
    %73 = tpu.matmul %71, %72, %cst_16 {dimension_numbers = #tpu.dot_dimension_numbers<[1], [0], [0], [1], [0, 0, 1, 1], [], []>} : vector<128x128xf32>, vector<128x128xf32>, vector<128x128xf32> -> vector<128x128xf32>
    %c0_17 = arith.constant 0 : index
    %c0_18 = arith.constant 0 : index
    %74 = vector.load %arg6[%c0_17, %c0_18] : memref<1x128xf32, #tpu.memory_space<vmem>>, vector<1x128xf32>
    %75 = vector.broadcast %74 : vector<1x128xf32> to vector<128x128xf32>
    %76 = arith.addf %73, %75 : vector<128x128xf32>
    %c0_19 = arith.constant 0 : index
    %c0_20 = arith.constant 0 : index
    %77 = vector.load %arg7[%c0_19, %c0_20] : memref<128x128xf32, #tpu.memory_space<vmem>>, vector<128x128xf32>
    tpu.vector_store %arg7[%c0_19, %c0_20], %76 {strides = array<i32>} : memref<128x128xf32, #tpu.memory_space<vmem>>, vector<128x128xf32>,
    return
  }
  func.func @transform_0(%arg0: i32) -> (i32, i32) {
    %c0_i32 = arith.constant 0 : i32
    %c0_i32_0 = arith.constant 0 : i32
    return %arg0, %c0_i32 : i32, i32
  }
  func.func @transform_1(%arg0: i32) -> (i32, i32) {
    %c0_i32 = arith.constant 0 : i32
    %c0_i32_0 = arith.constant 0 : i32
    %c0_i32_1 = arith.constant 0 : i32
    return %c0_i32, %c0_i32_0 : i32, i32
  }
  func.func @transform_2(%arg0: i32) -> (i32, i32) {
    %c0_i32 = arith.constant 0 : i32
    %c0_i32_0 = arith.constant 0 : i32
    %c0_i32_1 = arith.constant 0 : i32
    return %c0_i32, %c0_i32_0 : i32, i32
  }
  func.func @transform_3(%arg0: i32) -> (i32, i32) {
    %c0_i32 = arith.constant 0 : i32
    %c0_i32_0 = arith.constant 0 : i32
    %c0_i32_1 = arith.constant 0 : i32
    return %c0_i32, %c0_i32_0 : i32, i32
  }
  func.func @transform_4(%arg0: i32) -> (i32, i32) {
    %c0_i32 = arith.constant 0 : i32
    %c0_i32_0 = arith.constant 0 : i32
    %c0_i32_1 = arith.constant 0 : i32
    return %c0_i32, %c0_i32_0 : i32, i32
  }
  func.func @transform_5(%arg0: i32) -> (i32, i32) {
    %c0_i32 = arith.constant 0 : i32
    %c0_i32_0 = arith.constant 0 : i32
    %c0_i32_1 = arith.constant 0 : i32
    return %c0_i32, %c0_i32_0 : i32, i32
  }
  func.func @transform_6(%arg0: i32) -> (i32, i32) {
    %c0_i32 = arith.constant 0 : i32
    %c0_i32_0 = arith.constant 0 : i32
    return %arg0, %c0_i32 : i32, i32
  }
}

</mosaic_0001>

<llo_original>
// kernel: tpu_custom_call.1
$region0: #{tpu_custom_call.1}
  #allocation0 [shape = 'u32[]', space=smem, size = 0x4, offset = 0x4, fixed_abs, tag = 'smem constant byte address 0x4 - core index']
  #allocation1 [shape = 'u32[144,128]{1,0:T(1,128)}', space=vmem, size = 0x12000, scoped, tag = 'internal scratch']
  %s0 = inlined_call_operand.vmem [shape: s32[128,8], index: 0, kind: input, shape index: {}]
  %s1 = inlined_call_operand.vmem [shape: f32[128,128], index: 1, kind: input, shape index: {}]
  %s2 = inlined_call_operand.hbm [shape: f32[128,128], index: 2, kind: input, shape index: {}]
  %s3 = inlined_call_operand.vmem [shape: f32[1,128], index: 3, kind: input, shape index: {}]
  %s4 = inlined_call_operand.hbm [shape: f32[128,128], index: 4, kind: input, shape index: {}]
  %s5 = inlined_call_operand.vmem [shape: f32[1,128], index: 5, kind: input, shape index: {}]
  %s6 = inlined_call_operand.hbm [shape: f32[128,128], index: 6, kind: output, shape index: {}]
  %s7 = sld [smem:[#allocation0]]
  $region42: #{tpu_custom_call.1} parent=0
    _
  %s9 = ssub.s32 1, %s7
  %s10 = scalar_select 0, %s9, %s7
  $region1: #{tpu_custom_call.1} parent=0
    #allocation2 [shape = 'u8[65536]{0}', space=vmem, size = 0x10000, scoped, tag = 'input window, operand 2, single buffered']
    #allocation3 [shape = 's32[1]{0}', space=sflag, size = 0x4, scoped, tag = 'scoped memory for tpu_custom_call.1']
    #allocation4 [shape = 's32[1]{0}', space=sflag, size = 0x4, scoped, tag = 'scoped memory for tpu_custom_call.1']
    #allocation5 [shape = 'u8[65536]{0}', space=vmem, size = 0x10000, scoped, tag = 'input window, operand 4, single buffered']
    #allocation6 [shape = 's32[1]{0}', space=sflag, size = 0x4, scoped, tag = 'scoped memory for tpu_custom_call.1']
    #allocation7 [shape = 'u8[65536]{0}', space=vmem, size = 0x10000, scoped, tag = 'output window, operand 0, single buffered']
    %11 = vsyncpa [#allocation3], 0
    %12 = vsyncpa [#allocation6], 0
    %13 = vsyncpa [#allocation4], 0
    // Predicated region
    $region2: #{tpu_custom_call.1} parent=1 // pred_check
      _
    $region3: #{tpu_custom_call.1} parent=1 // pred_check_branch
      %15 = sbr.rel (0) target = $region5
    $region4: #{tpu_custom_call.1} parent=1 // pred_region
      _
    $region5: #{tpu_custom_call.1} parent=1 // pred_fallthru
      _
    // Predicated region
    $region6: #{tpu_custom_call.1} parent=1 // pred_check
      _
    $region7: #{tpu_custom_call.1} parent=1 // pred_check_branch
      %17 = sbr.rel (0) target = $region9
    $region8: #{tpu_custom_call.1} parent=1 // pred_region
      _
    $region9: #{tpu_custom_call.1} parent=1 // pred_fallthru
      _
    // Predicated region
    $region10: #{tpu_custom_call.1} parent=1 // pred_check
      _
    $region11: #{tpu_custom_call.1} parent=1 // pred_check_branch
      %19 = sbr.rel (0) target = $region13
    $region12: #{tpu_custom_call.1} parent=1 // pred_region
      %s21 = ssub.s32 2048, 2048
      %22 = vsyncadd [#allocation3], %s21
      %s23 = sshll.u32 [#allocation2], 4
      %s24 = int_to_ptr.vmem [resolvable:$true] %s23
      %29 = dma.hbm_to_vmem [thread:$0]  %s2, 2048, %s24, [#allocation3], 128, 128, 8
    $region13: #{tpu_custom_call.1} parent=1 // pred_fallthru
      _
    // Predicated region
    $region14: #{tpu_custom_call.1} parent=1 // pred_check
      _
    $region15: #{tpu_custom_call.1} parent=1 // pred_check_branch
      %31 = sbr.rel (0) target = $region17
    $region16: #{tpu_custom_call.1} parent=1 // pred_region
      _
    $region17: #{tpu_custom_call.1} parent=1 // pred_fallthru
      _
    // Predicated region
    $region18: #{tpu_custom_call.1} parent=1 // pred_check
      _
    $region19: #{tpu_custom_call.1} parent=1 // pred_check_branch
      %33 = sbr.rel (0) target = $region21
    $region20: #{tpu_custom_call.1} parent=1 // pred_region
      %s35 = ssub.s32 2048, 2048
      %36 = vsyncadd [#allocation6], %s35
      %s37 = sshll.u32 [#allocation5], 4
      %s38 = int_to_ptr.vmem [resolvable:$true] %s37
      %43 = dma.hbm_to_vmem [thread:$0]  %s4, 2048, %s38, [#allocation6], 128, 128, 8
    $region21: #{tpu_custom_call.1} parent=1 // pred_fallthru
      _
    // Predicated region
    $region22: #{tpu_custom_call.1} parent=1 // pred_check
      _
    $region23: #{tpu_custom_call.1} parent=1 // pred_check_branch
      %45 = sbr.rel (0) target = $region25
    $region24: #{tpu_custom_call.1} parent=1 // pred_region
      _
    $region25: #{tpu_custom_call.1} parent=1 // pred_fallthru
      _
    // Predicated region
    $region26: #{tpu_custom_call.1} parent=1 // pred_check
      _
    $region27: #{tpu_custom_call.1} parent=1 // pred_check_branch
      %47 = sbr.rel (0) target = $region29
    $region28: #{tpu_custom_call.1} parent=1 // pred_region
      %48 = dma.done [#allocation3], 2048
    $region29: #{tpu_custom_call.1} parent=1 // pred_fallthru
      _
    // Predicated region
    $region30: #{tpu_custom_call.1} parent=1 // pred_check
      _
    $region31: #{tpu_custom_call.1} parent=1 // pred_check_branch
      %50 = sbr.rel (0) target = $region33
    $region32: #{tpu_custom_call.1} parent=1 // pred_region
      %51 = dma.done [#allocation6], 2048
    $region33: #{tpu_custom_call.1} parent=1 // pred_fallthru
      _
    %v52 = vld [vmem:[%s0] sm:$0xff]
    %v53 = vld [vmem:[%s0 + $0x8] sm:$0xff]
    %v54 = vld [vmem:[%s0 + $0x10] sm:$0xff]
    %v55 = vld [vmem:[%s0 + $0x18] sm:$0xff]
    %v56 = vld [vmem:[%s0 + $0x20] sm:$0xff]
    %v57 = vld [vmem:[%s0 + $0x28] sm:$0xff]
    %v58 = vld [vmem:[%s0 + $0x30] sm:$0xff]
    %v59 = vld [vmem:[%s0 + $0x38] sm:$0xff]
    %v60 = vld [vmem:[%s0 + $0x40] sm:$0xff]
    %v61 = vld [vmem:[%s0 + $0x48] sm:$0xff]
    %v62 = vld [vmem:[%s0 + $0x50] sm:$0xff]
    %v63 = vld [vmem:[%s0 + $0x58] sm:$0xff]
    %v64 = vld [vmem:[%s0 + $0x60] sm:$0xff]
    %v65 = vld [vmem:[%s0 + $0x68] sm:$0xff]
    %v66 = vld [vmem:[%s0 + $0x70] sm:$0xff]
    %v67 = vld [vmem:[%s0 + $0x78] sm:$0xff]
    %v68 = vlaneseq
    %v69 = vand.u32 %v68, 127
    %70 = vset.pattern.permute.xlu0 0
    %71 = vperm.xlu0 %70, %v52
    %v72 = vpop.permute.xlu0 %71
    %73 = vset.pattern.permute.xlu0 0
    %74 = vperm.xlu0 %73, %v53
    %v75 = vpop.permute.xlu0 %74
    %76 = vset.pattern.permute.xlu0 0
    %77 = vperm.xlu0 %76, %v54
    %v78 = vpop.permute.xlu0 %77
    %79 = vset.pattern.permute.xlu0 0
    %80 = vperm.xlu0 %79, %v55
    %v81 = vpop.permute.xlu0 %80
    %82 = vset.pattern.permute.xlu0 0
    %83 = vperm.xlu0 %82, %v56
    %v84 = vpop.permute.xlu0 %83
    %85 = vset.pattern.permute.xlu0 0
    %86 = vperm.xlu0 %85, %v57
    %v87 = vpop.permute.xlu0 %86
    %88 = vset.pattern.permute.xlu0 0
    %89 = vperm.xlu0 %88, %v58
    %v90 = vpop.permute.xlu0 %89
    %91 = vset.pattern.permute.xlu0 0
    %92 = vperm.xlu0 %91, %v59
    %v93 = vpop.permute.xlu0 %92
    %94 = vset.pattern.permute.xlu0 0
    %95 = vperm.xlu0 %94, %v60
    %v96 = vpop.permute.xlu0 %95
    %97 = vset.pattern.permute.xlu0 0
    %98 = vperm.xlu0 %97, %v61
    %v99 = vpop.permute.xlu0 %98
    %100 = vset.pattern.permute.xlu0 0
    %101 = vperm.xlu0 %100, %v62
    %v102 = vpop.permute.xlu0 %101
    %103 = vset.pattern.permute.xlu0 0
    %104 = vperm.xlu0 %103, %v63
    %v105 = vpop.permute.xlu0 %104
    %106 = vset.pattern.permute.xlu0 0
    %107 = vperm.xlu0 %106, %v64
    %v108 = vpop.permute.xlu0 %107
    %109 = vset.pattern.permute.xlu0 0
    %110 = vperm.xlu0 %109, %v65
    %v111 = vpop.permute.xlu0 %110
    %112 = vset.pattern.permute.xlu0 0
    %113 = vperm.xlu0 %112, %v66
    %v114 = vpop.permute.xlu0 %113
    %115 = vset.pattern.permute.xlu0 0
    %116 = vperm.xlu0 %115, %v67
    %v117 = vpop.permute.xlu0 %116
    %vm118 = vcmp.eq.s32.totalorder %v72, %v69
    %vm119 = vcmp.eq.s32.totalorder %v75, %v69
    %vm120 = vcmp.eq.s32.totalorder %v78, %v69
    %vm121 = vcmp.eq.s32.totalorder %v81, %v69
    %vm122 = vcmp.eq.s32.totalorder %v84, %v69
    %vm123 = vcmp.eq.s32.totalorder %v87, %v69
    %vm124 = vcmp.eq.s32.totalorder %v90, %v69
    %vm125 = vcmp.eq.s32.totalorder %v93, %v69
    %vm126 = vcmp.eq.s32.totalorder %v96, %v69
    %vm127 = vcmp.eq.s32.totalorder %v99, %v69
    %vm128 = vcmp.eq.s32.totalorder %v102, %v69
    %vm129 = vcmp.eq.s32.totalorder %v105, %v69
    %vm130 = vcmp.eq.s32.totalorder %v108, %v69
    %vm131 = vcmp.eq.s32.totalorder %v111, %v69
    %vm132 = vcmp.eq.s32.totalorder %v114, %v69
    %vm133 = vcmp.eq.s32.totalorder %v117, %v69
    %v134 = vsel %vm118, 1, 0
    %v135 = vsel %vm119, 1, 0
    %v136 = vsel %vm120, 1, 0
    %v137 = vsel %vm121, 1, 0
    %v138 = vsel %vm122, 1, 0
    %v139 = vsel %vm123, 1, 0
    %v140 = vsel %vm124, 1, 0
    %v141 = vsel %vm125, 1, 0
    %v142 = vsel %vm126, 1, 0
    %v143 = vsel %vm127, 1, 0
    %v144 = vsel %vm128, 1, 0
    %v145 = vsel %vm129, 1, 0
    %v146 = vsel %vm130, 1, 0
    %v147 = vsel %vm131, 1, 0
    %v148 = vsel %vm132, 1, 0
    %v149 = vsel %vm133, 1, 0
    %v150 = vcvt.s32.f32 %v134
    %v151 = vcvt.s32.f32 %v135
    %v152 = vcvt.s32.f32 %v136
    %v153 = vcvt.s32.f32 %v137
    %v154 = vcvt.s32.f32 %v138
    %v155 = vcvt.s32.f32 %v139
    %v156 = vcvt.s32.f32 %v140
    %v157 = vcvt.s32.f32 %v141
    %v158 = vcvt.s32.f32 %v142
    %v159 = vcvt.s32.f32 %v143
    %v160 = vcvt.s32.f32 %v144
    %v161 = vcvt.s32.f32 %v145
    %v162 = vcvt.s32.f32 %v146
    %v163 = vcvt.s32.f32 %v147
    %v164 = vcvt.s32.f32 %v148
    %v165 = vcvt.s32.f32 %v149
    %v166 = vadd.f32 %v150, 0.0
    %v167 = vadd.f32 %v151, 0.0
    %v168 = vadd.f32 %v152, 0.0
    %v169 = vadd.f32 %v153, 0.0
    %v170 = vadd.f32 %v154, 0.0
    %v171 = vadd.f32 %v155, 0.0
    %v172 = vadd.f32 %v156, 0.0
    %v173 = vadd.f32 %v157, 0.0
    %v174 = vadd.f32 %v158, 0.0
    %v175 = vadd.f32 %v159, 0.0
    %v176 = vadd.f32 %v160, 0.0
    %v177 = vadd.f32 %v161, 0.0
    %v178 = vadd.f32 %v162, 0.0
    %v179 = vadd.f32 %v163, 0.0
    %v180 = vadd.f32 %v164, 0.0
    %v181 = vadd.f32 %v165, 0.0
    %182 = vset.pattern.permute.xlu0 1
    %183 = vperm.xlu0 %182, %v52
    %v184 = vpop.permute.xlu0 %183
    %185 = vset.pattern.permute.xlu0 1
    %186 = vperm.xlu0 %185, %v53
    %v187 = vpop.permute.xlu0 %186
    %188 = vset.pattern.permute.xlu0 1
    %189 = vperm.xlu0 %188, %v54
    %v190 = vpop.permute.xlu0 %189
    %191 = vset.pattern.permute.xlu0 1
    %192 = vperm.xlu0 %191, %v55
    %v193 = vpop.permute.xlu0 %192
    %194 = vset.pattern.permute.xlu0 1
    %195 = vperm.xlu0 %194, %v56
    %v196 = vpop.permute.xlu0 %195
    %197 = vset.pattern.permute.xlu0 1
    %198 = vperm.xlu0 %197, %v57
    %v199 = vpop.permute.xlu0 %198
    %200 = vset.pattern.permute.xlu0 1
    %201 = vperm.xlu0 %200, %v58
    %v202 = vpop.permute.xlu0 %201
    %203 = vset.pattern.permute.xlu0 1
    %204 = vperm.xlu0 %203, %v59
    %v205 = vpop.permute.xlu0 %204
    %206 = vset.pattern.permute.xlu0 1
    %207 = vperm.xlu0 %206, %v60
    %v208 = vpop.permute.xlu0 %207
    %209 = vset.pattern.permute.xlu0 1
    %210 = vperm.xlu0 %209, %v61
    %v211 = vpop.permute.xlu0 %210
    %212 = vset.pattern.permute.xlu0 1
    %213 = vperm.xlu0 %212, %v62
    %v214 = vpop.permute.xlu0 %213
    %215 = vset.pattern.permute.xlu0 1
    %216 = vperm.xlu0 %215, %v63
    %v217 = vpop.permute.xlu0 %216
    %218 = vset.pattern.permute.xlu0 1
    %219 = vperm.xlu0 %218, %v64
    %v220 = vpop.permute.xlu0 %219
    %221 = vset.pattern.permute.xlu0 1
    %222 = vperm.xlu0 %221, %v65
    %v223 = vpop.permute.xlu0 %222
    %224 = vset.pattern.permute.xlu0 1
    %225 = vperm.xlu0 %224, %v66
    %v226 = vpop.permute.xlu0 %225
    %227 = vset.pattern.permute.xlu0 1
    %228 = vperm.xlu0 %227, %v67
    %v229 = vpop.permute.xlu0 %228
    %vm230 = vcmp.eq.s32.totalorder %v184, %v69
    %vm231 = vcmp.eq.s32.totalorder %v187, %v69
    %vm232 = vcmp.eq.s32.totalorder %v190, %v69
    %vm233 = vcmp.eq.s32.totalorder %v193, %v69
    %vm234 = vcmp.eq.s32.totalorder %v196, %v69
    %vm235 = vcmp.eq.s32.totalorder %v199, %v69
    %vm236 = vcmp.eq.s32.totalorder %v202, %v69
    %vm237 = vcmp.eq.s32.totalorder %v205, %v69
    %vm238 = vcmp.eq.s32.totalorder %v208, %v69
    %vm239 = vcmp.eq.s32.totalorder %v211, %v69
    %vm240 = vcmp.eq.s32.totalorder %v214, %v69
    %vm241 = vcmp.eq.s32.totalorder %v217, %v69
    %vm242 = vcmp.eq.s32.totalorder %v220, %v69
    %vm243 = vcmp.eq.s32.totalorder %v223, %v69
    %vm244 = vcmp.eq.s32.totalorder %v226, %v69
    %vm245 = vcmp.eq.s32.totalorder %v229, %v69
    %v246 = vsel %vm230, 1, 0
    %v247 = vsel %vm231, 1, 0
    %v248 = vsel %vm232, 1, 0
    %v249 = vsel %vm233, 1, 0
    %v250 = vsel %vm234, 1, 0
    %v251 = vsel %vm235, 1, 0
    %v252 = vsel %vm236, 1, 0
    %v253 = vsel %vm237, 1, 0
    %v254 = vsel %vm238, 1, 0
    %v255 = vsel %vm239, 1, 0
    %v256 = vsel %vm240, 1, 0
    %v257 = vsel %vm241, 1, 0
    %v258 = vsel %vm242, 1, 0
    %v259 = vsel %vm243, 1, 0
    %v260 = vsel %vm244, 1, 0
    %v261 = vsel %vm245, 1, 0
    %v262 = vcvt.s32.f32 %v246
    %v263 = vcvt.s32.f32 %v247
    %v264 = vcvt.s32.f32 %v248
    %v265 = vcvt.s32.f32 %v249
    %v266 = vcvt.s32.f32 %v250
    %v267 = vcvt.s32.f32 %v251
    %v268 = vcvt.s32.f32 %v252
    %v269 = vcvt.s32.f32 %v253
    %v270 = vcvt.s32.f32 %v254
    %v271 = vcvt.s32.f32 %v255
    %v272 = vcvt.s32.f32 %v256
    %v273 = vcvt.s32.f32 %v257
    %v274 = vcvt.s32.f32 %v258
    %v275 = vcvt.s32.f32 %v259
    %v276 = vcvt.s32.f32 %v260
    %v277 = vcvt.s32.f32 %v261
    %v278 = vadd.f32 %v166, %v262
    %v279 = vadd.f32 %v167, %v263
    %v280 = vadd.f32 %v168, %v264
    %v281 = vadd.f32 %v169, %v265
    %v282 = vadd.f32 %v170, %v266
    %v283 = vadd.f32 %v171, %v267
    %v284 = vadd.f32 %v172, %v268
    %v285 = vadd.f32 %v173, %v269
    %v286 = vadd.f32 %v174, %v270
    %v287 = vadd.f32 %v175, %v271
    %v288 = vadd.f32 %v176, %v272
    %v289 = vadd.f32 %v177, %v273
    %v290 = vadd.f32 %v178, %v274
    %v291 = vadd.f32 %v179, %v275
    %v292 = vadd.f32 %v180, %v276
    %v293 = vadd.f32 %v181, %v277
    %294 = vset.pattern.permute.xlu0 2
    %295 = vperm.xlu0 %294, %v52
    %v296 = vpop.permute.xlu0 %295
    %297 = vset.pattern.permute.xlu0 2
    %298 = vperm.xlu0 %297, %v53
    %v299 = vpop.permute.xlu0 %298
    %300 = vset.pattern.permute.xlu0 2
    %301 = vperm.xlu0 %300, %v54
    %v302 = vpop.permute.xlu0 %301
    %303 = vset.pattern.permute.xlu0 2
    %304 = vperm.xlu0 %303, %v55
    %v305 = vpop.permute.xlu0 %304
    %306 = vset.pattern.permute.xlu0 2
    %307 = vperm.xlu0 %306, %v56
    %v308 = vpop.permute.xlu0 %307
    %309 = vset.pattern.permute.xlu0 2
    %310 = vperm.xlu0 %309, %v57
    %v311 = vpop.permute.xlu0 %310
    %312 = vset.pattern.permute.xlu0 2
    %313 = vperm.xlu0 %312, %v58
    %v314 = vpop.permute.xlu0 %313
    %315 = vset.pattern.permute.xlu0 2
    %316 = vperm.xlu0 %315, %v59
    %v317 = vpop.permute.xlu0 %316
    %318 = vset.pattern.permute.xlu0 2
    %319 = vperm.xlu0 %318, %v60
    %v320 = vpop.permute.xlu0 %319
    %321 = vset.pattern.permute.xlu0 2
    %322 = vperm.xlu0 %321, %v61
    %v323 = vpop.permute.xlu0 %322
    %324 = vset.pattern.permute.xlu0 2
    %325 = vperm.xlu0 %324, %v62
    %v326 = vpop.permute.xlu0 %325
    %327 = vset.pattern.permute.xlu0 2
    %328 = vperm.xlu0 %327, %v63
    %v329 = vpop.permute.xlu0 %328
    %330 = vset.pattern.permute.xlu0 2
    %331 = vperm.xlu0 %330, %v64
    %v332 = vpop.permute.xlu0 %331
    %333 = vset.pattern.permute.xlu0 2
    %334 = vperm.xlu0 %333, %v65
    %v335 = vpop.permute.xlu0 %334
    %336 = vset.pattern.permute.xlu0 2
    %337 = vperm.xlu0 %336, %v66
    %v338 = vpop.permute.xlu0 %337
    %339 = vset.pattern.permute.xlu0 2
    %340 = vperm.xlu0 %339, %v67
    %v341 = vpop.permute.xlu0 %340
    %vm342 = vcmp.eq.s32.totalorder %v296, %v69
    %vm343 = vcmp.eq.s32.totalorder %v299, %v69
    %vm344 = vcmp.eq.s32.totalorder %v302, %v69
    %vm345 = vcmp.eq.s32.totalorder %v305, %v69
    %vm346 = vcmp.eq.s32.totalorder %v308, %v69
    %vm347 = vcmp.eq.s32.totalorder %v311, %v69
    %vm348 = vcmp.eq.s32.totalorder %v314, %v69
    %vm349 = vcmp.eq.s32.totalorder %v317, %v69
    %vm350 = vcmp.eq.s32.totalorder %v320, %v69
    %vm351 = vcmp.eq.s32.totalorder %v323, %v69
    %vm352 = vcmp.eq.s32.totalorder %v326, %v69
    %vm353 = vcmp.eq.s32.totalorder %v329, %v69
    %vm354 = vcmp.eq.s32.totalorder %v332, %v69
    %vm355 = vcmp.eq.s32.totalorder %v335, %v69
    %vm356 = vcmp.eq.s32.totalorder %v338, %v69
    %vm357 = vcmp.eq.s32.totalorder %v341, %v69
    %v358 = vsel %vm342, 1, 0
    %v359 = vsel %vm343, 1, 0
    %v360 = vsel %vm344, 1, 0
    %v361 = vsel %vm345, 1, 0
    %v362 = vsel %vm346, 1, 0
    %v363 = vsel %vm347, 1, 0
    %v364 = vsel %vm348, 1, 0
    %v365 = vsel %vm349, 1, 0
    %v366 = vsel %vm350, 1, 0
    %v367 = vsel %vm351, 1, 0
    %v368 = vsel %vm352, 1, 0
    %v369 = vsel %vm353, 1, 0
    %v370 = vsel %vm354, 1, 0
    %v371 = vsel %vm355, 1, 0
    %v372 = vsel %vm356, 1, 0
    %v373 = vsel %vm357, 1, 0
    %v374 = vcvt.s32.f32 %v358
    %v375 = vcvt.s32.f32 %v359
    %v376 = vcvt.s32.f32 %v360
    %v377 = vcvt.s32.f32 %v361
    %v378 = vcvt.s32.f32 %v362
    %v379 = vcvt.s32.f32 %v363
    %v380 = vcvt.s32.f32 %v364
    %v381 = vcvt.s32.f32 %v365
    %v382 = vcvt.s32.f32 %v366
    %v383 = vcvt.s32.f32 %v367
    %v384 = vcvt.s32.f32 %v368
    %v385 = vcvt.s32.f32 %v369
    %v386 = vcvt.s32.f32 %v370
    %v387 = vcvt.s32.f32 %v371
    %v388 = vcvt.s32.f32 %v372
    %v389 = vcvt.s32.f32 %v373
    %v390 = vadd.f32 %v278, %v374
    %v391 = vadd.f32 %v279, %v375
    %v392 = vadd.f32 %v280, %v376
    %v393 = vadd.f32 %v281, %v377
    %v394 = vadd.f32 %v282, %v378
    %v395 = vadd.f32 %v283, %v379
    %v396 = vadd.f32 %v284, %v380
    %v397 = vadd.f32 %v285, %v381
    %v398 = vadd.f32 %v286, %v382
    %v399 = vadd.f32 %v287, %v383
    %v400 = vadd.f32 %v288, %v384
    %v401 = vadd.f32 %v289, %v385
    %v402 = vadd.f32 %v290, %v386
    %v403 = vadd.f32 %v291, %v387
    %v404 = vadd.f32 %v292, %v388
    %v405 = vadd.f32 %v293, %v389
    %406 = vset.pattern.permute.xlu0 3
    %407 = vperm.xlu0 %406, %v52
    %v408 = vpop.permute.xlu0 %407
    %409 = vset.pattern.permute.xlu0 3
    %410 = vperm.xlu0 %409, %v53
    %v411 = vpop.permute.xlu0 %410
    %412 = vset.pattern.permute.xlu0 3
    %413 = vperm.xlu0 %412, %v54
    %v414 = vpop.permute.xlu0 %413
    %415 = vset.pattern.permute.xlu0 3
    %416 = vperm.xlu0 %415, %v55
    %v417 = vpop.permute.xlu0 %416
    %418 = vset.pattern.permute.xlu0 3
    %419 = vperm.xlu0 %418, %v56
    %v420 = vpop.permute.xlu0 %419
    %421 = vset.pattern.permute.xlu0 3
    %422 = vperm.xlu0 %421, %v57
    %v423 = vpop.permute.xlu0 %422
    %424 = vset.pattern.permute.xlu0 3
    %425 = vperm.xlu0 %424, %v58
    %v426 = vpop.permute.xlu0 %425
    %427 = vset.pattern.permute.xlu0 3
    %428 = vperm.xlu0 %427, %v59
    %v429 = vpop.permute.xlu0 %428
    %430 = vset.pattern.permute.xlu0 3
    %431 = vperm.xlu0 %430, %v60
    %v432 = vpop.permute.xlu0 %431
    %433 = vset.pattern.permute.xlu0 3
    %434 = vperm.xlu0 %433, %v61
    %v435 = vpop.permute.xlu0 %434
    %436 = vset.pattern.permute.xlu0 3
    %437 = vperm.xlu0 %436, %v62
    %v438 = vpop.permute.xlu0 %437
    %439 = vset.pattern.permute.xlu0 3
    %440 = vperm.xlu0 %439, %v63
    %v441 = vpop.permute.xlu0 %440
    %442 = vset.pattern.permute.xlu0 3
    %443 = vperm.xlu0 %442, %v64
    %v444 = vpop.permute.xlu0 %443
    %445 = vset.pattern.permute.xlu0 3
    %446 = vperm.xlu0 %445, %v65
    %v447 = vpop.permute.xlu0 %446
    %448 = vset.pattern.permute.xlu0 3
    %449 = vperm.xlu0 %448, %v66
    %v450 = vpop.permute.xlu0 %449
    %451 = vset.pattern.permute.xlu0 3
    %452 = vperm.xlu0 %451, %v67
    %v453 = vpop.permute.xlu0 %452
    %vm454 = vcmp.eq.s32.totalorder %v408, %v69
    %vm455 = vcmp.eq.s32.totalorder %v411, %v69
    %vm456 = vcmp.eq.s32.totalorder %v414, %v69
    %vm457 = vcmp.eq.s32.totalorder %v417, %v69
    %vm458 = vcmp.eq.s32.totalorder %v420, %v69
    %vm459 = vcmp.eq.s32.totalorder %v423, %v69
    %vm460 = vcmp.eq.s32.totalorder %v426, %v69
    %vm461 = vcmp.eq.s32.totalorder %v429, %v69
    %vm462 = vcmp.eq.s32.totalorder %v432, %v69
    %vm463 = vcmp.eq.s32.totalorder %v435, %v69
    %vm464 = vcmp.eq.s32.totalorder %v438, %v69
    %vm465 = vcmp.eq.s32.totalorder %v441, %v69
    %vm466 = vcmp.eq.s32.totalorder %v444, %v69
    %vm467 = vcmp.eq.s32.totalorder %v447, %v69
    %vm468 = vcmp.eq.s32.totalorder %v450, %v69
    %vm469 = vcmp.eq.s32.totalorder %v453, %v69
    %v470 = vsel %vm454, 1, 0
    %v471 = vsel %vm455, 1, 0
    %v472 = vsel %vm456, 1, 0
    %v473 = vsel %vm457, 1, 0
    %v474 = vsel %vm458, 1, 0
    %v475 = vsel %vm459, 1, 0
    %v476 = vsel %vm460, 1, 0
    %v477 = vsel %vm461, 1, 0
    %v478 = vsel %vm462, 1, 0
    %v479 = vsel %vm463, 1, 0
    %v480 = vsel %vm464, 1, 0
    %v481 = vsel %vm465, 1, 0
    %v482 = vsel %vm466, 1, 0
    %v483 = vsel %vm467, 1, 0
    %v484 = vsel %vm468, 1, 0
    %v485 = vsel %vm469, 1, 0
    %v486 = vcvt.s32.f32 %v470
    %v487 = vcvt.s32.f32 %v471
    %v488 = vcvt.s32.f32 %v472
    %v489 = vcvt.s32.f32 %v473
    %v490 = vcvt.s32.f32 %v474
    %v491 = vcvt.s32.f32 %v475
    %v492 = vcvt.s32.f32 %v476
    %v493 = vcvt.s32.f32 %v477
    %v494 = vcvt.s32.f32 %v478
    %v495 = vcvt.s32.f32 %v479
    %v496 = vcvt.s32.f32 %v480
    %v497 = vcvt.s32.f32 %v481
    %v498 = vcvt.s32.f32 %v482
    %v499 = vcvt.s32.f32 %v483
    %v500 = vcvt.s32.f32 %v484
    %v501 = vcvt.s32.f32 %v485
    %v502 = vadd.f32 %v390, %v486
    %v503 = vadd.f32 %v391, %v487
    %v504 = vadd.f32 %v392, %v488
    %v505 = vadd.f32 %v393, %v489
    %v506 = vadd.f32 %v394, %v490
    %v507 = vadd.f32 %v395, %v491
    %v508 = vadd.f32 %v396, %v492
    %v509 = vadd.f32 %v397, %v493
    %v510 = vadd.f32 %v398, %v494
    %v511 = vadd.f32 %v399, %v495
    %v512 = vadd.f32 %v400, %v496
    %v513 = vadd.f32 %v401, %v497
    %v514 = vadd.f32 %v402, %v498
    %v515 = vadd.f32 %v403, %v499
    %v516 = vadd.f32 %v404, %v500
    %v517 = vadd.f32 %v405, %v501
    %518 = vset.pattern.permute.xlu0 4
    %519 = vperm.xlu0 %518, %v52
    %v520 = vpop.permute.xlu0 %519
    %521 = vset.pattern.permute.xlu0 4
    %522 = vperm.xlu0 %521, %v53
    %v523 = vpop.permute.xlu0 %522
    %524 = vset.pattern.permute.xlu0 4
    %525 = vperm.xlu0 %524, %v54
    %v526 = vpop.permute.xlu0 %525
    %527 = vset.pattern.permute.xlu0 4
    %528 = vperm.xlu0 %527, %v55
    %v529 = vpop.permute.xlu0 %528
    %530 = vset.pattern.permute.xlu0 4
    %531 = vperm.xlu0 %530, %v56
    %v532 = vpop.permute.xlu0 %531
    %533 = vset.pattern.permute.xlu0 4
    %534 = vperm.xlu0 %533, %v57
    %v535 = vpop.permute.xlu0 %534
    %536 = vset.pattern.permute.xlu0 4
    %537 = vperm.xlu0 %536, %v58
    %v538 = vpop.permute.xlu0 %537
    %539 = vset.pattern.permute.xlu0 4
    %540 = vperm.xlu0 %539, %v59
    %v541 = vpop.permute.xlu0 %540
    %542 = vset.pattern.permute.xlu0 4
    %543 = vperm.xlu0 %542, %v60
    %v544 = vpop.permute.xlu0 %543
    %545 = vset.pattern.permute.xlu0 4
    %546 = vperm.xlu0 %545, %v61
    %v547 = vpop.permute.xlu0 %546
    %548 = vset.pattern.permute.xlu0 4
    %549 = vperm.xlu0 %548, %v62
    %v550 = vpop.permute.xlu0 %549
    %551 = vset.pattern.permute.xlu0 4
    %552 = vperm.xlu0 %551, %v63
    %v553 = vpop.permute.xlu0 %552
    %554 = vset.pattern.permute.xlu0 4
    %555 = vperm.xlu0 %554, %v64
    %v556 = vpop.permute.xlu0 %555
    %557 = vset.pattern.permute.xlu0 4
    %558 = vperm.xlu0 %557, %v65
    %v559 = vpop.permute.xlu0 %558
    %560 = vset.pattern.permute.xlu0 4
    %561 = vperm.xlu0 %560, %v66
    %v562 = vpop.permute.xlu0 %561
    %563 = vset.pattern.permute.xlu0 4
    %564 = vperm.xlu0 %563, %v67
    %v565 = vpop.permute.xlu0 %564
    %vm566 = vcmp.eq.s32.totalorder %v520, %v69
    %vm567 = vcmp.eq.s32.totalorder %v523, %v69
    %vm568 = vcmp.eq.s32.totalorder %v526, %v69
    %vm569 = vcmp.eq.s32.totalorder %v529, %v69
    %vm570 = vcmp.eq.s32.totalorder %v532, %v69
    %vm571 = vcmp.eq.s32.totalorder %v535, %v69
    %vm572 = vcmp.eq.s32.totalorder %v538, %v69
    %vm573 = vcmp.eq.s32.totalorder %v541, %v69
    %vm574 = vcmp.eq.s32.totalorder %v544, %v69
    %vm575 = vcmp.eq.s32.totalorder %v547, %v69
    %vm576 = vcmp.eq.s32.totalorder %v550, %v69
    %vm577 = vcmp.eq.s32.totalorder %v553, %v69
    %vm578 = vcmp.eq.s32.totalorder %v556, %v69
    %vm579 = vcmp.eq.s32.totalorder %v559, %v69
    %vm580 = vcmp.eq.s32.totalorder %v562, %v69
    %vm581 = vcmp.eq.s32.totalorder %v565, %v69
    %v582 = vsel %vm566, 1, 0
    %v583 = vsel %vm567, 1, 0
    %v584 = vsel %vm568, 1, 0
    %v585 = vsel %vm569, 1, 0
    %v586 = vsel %vm570, 1, 0
    %v587 = vsel %vm571, 1, 0
    %v588 = vsel %vm572, 1, 0
    %v589 = vsel %vm573, 1, 0
    %v590 = vsel %vm574, 1, 0
    %v591 = vsel %vm575, 1, 0
    %v592 = vsel %vm576, 1, 0
    %v593 = vsel %vm577, 1, 0
    %v594 = vsel %vm578, 1, 0
    %v595 = vsel %vm579, 1, 0
    %v596 = vsel %vm580, 1, 0
    %v597 = vsel %vm581, 1, 0
    %v598 = vcvt.s32.f32 %v582
    %v599 = vcvt.s32.f32 %v583
    %v600 = vcvt.s32.f32 %v584
    %v601 = vcvt.s32.f32 %v585
    %v602 = vcvt.s32.f32 %v586
    %v603 = vcvt.s32.f32 %v587
    %v604 = vcvt.s32.f32 %v588
    %v605 = vcvt.s32.f32 %v589
    %v606 = vcvt.s32.f32 %v590
    %v607 = vcvt.s32.f32 %v591
    %v608 = vcvt.s32.f32 %v592
    %v609 = vcvt.s32.f32 %v593
    %v610 = vcvt.s32.f32 %v594
    %v611 = vcvt.s32.f32 %v595
    %v612 = vcvt.s32.f32 %v596
    %v613 = vcvt.s32.f32 %v597
    %v614 = vadd.f32 %v502, %v598
    %v615 = vadd.f32 %v503, %v599
    %v616 = vadd.f32 %v504, %v600
    %v617 = vadd.f32 %v505, %v601
    %v618 = vadd.f32 %v506, %v602
    %v619 = vadd.f32 %v507, %v603
    %v620 = vadd.f32 %v508, %v604
    %v621 = vadd.f32 %v509, %v605
    %v622 = vadd.f32 %v510, %v606
    %v623 = vadd.f32 %v511, %v607
    %v624 = vadd.f32 %v512, %v608
    %v625 = vadd.f32 %v513, %v609
    %v626 = vadd.f32 %v514, %v610
    %v627 = vadd.f32 %v515, %v611
    %v628 = vadd.f32 %v516, %v612
    %v629 = vadd.f32 %v517, %v613
    %630 = vset.pattern.permute.xlu0 5
    %631 = vperm.xlu0 %630, %v52
    %v632 = vpop.permute.xlu0 %631
    %633 = vset.pattern.permute.xlu0 5
    %634 = vperm.xlu0 %633, %v53
    %v635 = vpop.permute.xlu0 %634
    %636 = vset.pattern.permute.xlu0 5
    %637 = vperm.xlu0 %636, %v54
    %v638 = vpop.permute.xlu0 %637
    %639 = vset.pattern.permute.xlu0 5
    %640 = vperm.xlu0 %639, %v55
    %v641 = vpop.permute.xlu0 %640
    %642 = vset.pattern.permute.xlu0 5
    %643 = vperm.xlu0 %642, %v56
    %v644 = vpop.permute.xlu0 %643
    %645 = vset.pattern.permute.xlu0 5
    %646 = vperm.xlu0 %645, %v57
    %v647 = vpop.permute.xlu0 %646
    %648 = vset.pattern.permute.xlu0 5
    %649 = vperm.xlu0 %648, %v58
    %v650 = vpop.permute.xlu0 %649
    %651 = vset.pattern.permute.xlu0 5
    %652 = vperm.xlu0 %651, %v59
    %v653 = vpop.permute.xlu0 %652
    %654 = vset.pattern.permute.xlu0 5
    %655 = vperm.xlu0 %654, %v60
    %v656 = vpop.permute.xlu0 %655
    %657 = vset.pattern.permute.xlu0 5
    %658 = vperm.xlu0 %657, %v61
    %v659 = vpop.permute.xlu0 %658
    %660 = vset.pattern.permute.xlu0 5
    %661 = vperm.xlu0 %660, %v62
    %v662 = vpop.permute.xlu0 %661
    %663 = vset.pattern.permute.xlu0 5
    %664 = vperm.xlu0 %663, %v63
    %v665 = vpop.permute.xlu0 %664
    %666 = vset.pattern.permute.xlu0 5
    %667 = vperm.xlu0 %666, %v64
    %v668 = vpop.permute.xlu0 %667
    %669 = vset.pattern.permute.xlu0 5
    %670 = vperm.xlu0 %669, %v65
    %v671 = vpop.permute.xlu0 %670
    %672 = vset.pattern.permute.xlu0 5
    %673 = vperm.xlu0 %672, %v66
    %v674 = vpop.permute.xlu0 %673
    %675 = vset.pattern.permute.xlu0 5
    %676 = vperm.xlu0 %675, %v67
    %v677 = vpop.permute.xlu0 %676
    %vm678 = vcmp.eq.s32.totalorder %v632, %v69
    %vm679 = vcmp.eq.s32.totalorder %v635, %v69
    %vm680 = vcmp.eq.s32.totalorder %v638, %v69
    %vm681 = vcmp.eq.s32.totalorder %v641, %v69
    %vm682 = vcmp.eq.s32.totalorder %v644, %v69
    %vm683 = vcmp.eq.s32.totalorder %v647, %v69
    %vm684 = vcmp.eq.s32.totalorder %v650, %v69
    %vm685 = vcmp.eq.s32.totalorder %v653, %v69
    %vm686 = vcmp.eq.s32.totalorder %v656, %v69
    %vm687 = vcmp.eq.s32.totalorder %v659, %v69
    %vm688 = vcmp.eq.s32.totalorder %v662, %v69
    %vm689 = vcmp.eq.s32.totalorder %v665, %v69
    %vm690 = vcmp.eq.s32.totalorder %v668, %v69
    %vm691 = vcmp.eq.s32.totalorder %v671, %v69
    %vm692 = vcmp.eq.s32.totalorder %v674, %v69
    %vm693 = vcmp.eq.s32.totalorder %v677, %v69
    %v694 = vsel %vm678, 1, 0
    %v695 = vsel %vm679, 1, 0
    %v696 = vsel %vm680, 1, 0
    %v697 = vsel %vm681, 1, 0
    %v698 = vsel %vm682, 1, 0
    %v699 = vsel %vm683, 1, 0
    %v700 = vsel %vm684, 1, 0
    %v701 = vsel %vm685, 1, 0
    %v702 = vsel %vm686, 1, 0
    %v703 = vsel %vm687, 1, 0
    %v704 = vsel %vm688, 1, 0
    %v705 = vsel %vm689, 1, 0
    %v706 = vsel %vm690, 1, 0
    %v707 = vsel %vm691, 1, 0
    %v708 = vsel %vm692, 1, 0
    %v709 = vsel %vm693, 1, 0
    %v710 = vcvt.s32.f32 %v694
    %v711 = vcvt.s32.f32 %v695
    %v712 = vcvt.s32.f32 %v696
    %v713 = vcvt.s32.f32 %v697
    %v714 = vcvt.s32.f32 %v698
    %v715 = vcvt.s32.f32 %v699
    %v716 = vcvt.s32.f32 %v700
    %v717 = vcvt.s32.f32 %v701
    %v718 = vcvt.s32.f32 %v702
    %v719 = vcvt.s32.f32 %v703
    %v720 = vcvt.s32.f32 %v704
    %v721 = vcvt.s32.f32 %v705
    %v722 = vcvt.s32.f32 %v706
    %v723 = vcvt.s32.f32 %v707
    %v724 = vcvt.s32.f32 %v708
    %v725 = vcvt.s32.f32 %v709
    %v726 = vadd.f32 %v614, %v710
    %v727 = vadd.f32 %v615, %v711
    %v728 = vadd.f32 %v616, %v712
    %v729 = vadd.f32 %v617, %v713
    %v730 = vadd.f32 %v618, %v714
    %v731 = vadd.f32 %v619, %v715
    %v732 = vadd.f32 %v620, %v716
    %v733 = vadd.f32 %v621, %v717
    %v734 = vadd.f32 %v622, %v718
    %v735 = vadd.f32 %v623, %v719
    %v736 = vadd.f32 %v624, %v720
    %v737 = vadd.f32 %v625, %v721
    %v738 = vadd.f32 %v626, %v722
    %v739 = vadd.f32 %v627, %v723
    %v740 = vadd.f32 %v628, %v724
    %v741 = vadd.f32 %v629, %v725
    %742 = vset.pattern.permute.xlu0 6
    %743 = vperm.xlu0 %742, %v52
    %v744 = vpop.permute.xlu0 %743
    %745 = vset.pattern.permute.xlu0 6
    %746 = vperm.xlu0 %745, %v53
    %v747 = vpop.permute.xlu0 %746
    %748 = vset.pattern.permute.xlu0 6
    %749 = vperm.xlu0 %748, %v54
    %v750 = vpop.permute.xlu0 %749
    %751 = vset.pattern.permute.xlu0 6
    %752 = vperm.xlu0 %751, %v55
    %v753 = vpop.permute.xlu0 %752
    %754 = vset.pattern.permute.xlu0 6
    %755 = vperm.xlu0 %754, %v56
    %v756 = vpop.permute.xlu0 %755
    %757 = vset.pattern.permute.xlu0 6
    %758 = vperm.xlu0 %757, %v57
    %v759 = vpop.permute.xlu0 %758
    %760 = vset.pattern.permute.xlu0 6
    %761 = vperm.xlu0 %760, %v58
    %v762 = vpop.permute.xlu0 %761
    %763 = vset.pattern.permute.xlu0 6
    %764 = vperm.xlu0 %763, %v59
    %v765 = vpop.permute.xlu0 %764
    %766 = vset.pattern.permute.xlu0 6
    %767 = vperm.xlu0 %766, %v60
    %v768 = vpop.permute.xlu0 %767
    %769 = vset.pattern.permute.xlu0 6
    %770 = vperm.xlu0 %769, %v61
    %v771 = vpop.permute.xlu0 %770
    %772 = vset.pattern.permute.xlu0 6
    %773 = vperm.xlu0 %772, %v62
    %v774 = vpop.permute.xlu0 %773
    %775 = vset.pattern.permute.xlu0 6
    %776 = vperm.xlu0 %775, %v63
    %v777 = vpop.permute.xlu0 %776
    %778 = vset.pattern.permute.xlu0 6
    %779 = vperm.xlu0 %778, %v64
    %v780 = vpop.permute.xlu0 %779
    %781 = vset.pattern.permute.xlu0 6
    %782 = vperm.xlu0 %781, %v65
    %v783 = vpop.permute.xlu0 %782
    %784 = vset.pattern.permute.xlu0 6
    %785 = vperm.xlu0 %784, %v66
    %v786 = vpop.permute.xlu0 %785
    %787 = vset.pattern.permute.xlu0 6
    %788 = vperm.xlu0 %787, %v67
    %v789 = vpop.permute.xlu0 %788
    %vm790 = vcmp.eq.s32.totalorder %v744, %v69
    %vm791 = vcmp.eq.s32.totalorder %v747, %v69
    %vm792 = vcmp.eq.s32.totalorder %v750, %v69
    %vm793 = vcmp.eq.s32.totalorder %v753, %v69
    %vm794 = vcmp.eq.s32.totalorder %v756, %v69
    %vm795 = vcmp.eq.s32.totalorder %v759, %v69
    %vm796 = vcmp.eq.s32.totalorder %v762, %v69
    %vm797 = vcmp.eq.s32.totalorder %v765, %v69
    %vm798 = vcmp.eq.s32.totalorder %v768, %v69
    %vm799 = vcmp.eq.s32.totalorder %v771, %v69
    %vm800 = vcmp.eq.s32.totalorder %v774, %v69
    %vm801 = vcmp.eq.s32.totalorder %v777, %v69
    %vm802 = vcmp.eq.s32.totalorder %v780, %v69
    %vm803 = vcmp.eq.s32.totalorder %v783, %v69
    %vm804 = vcmp.eq.s32.totalorder %v786, %v69
    %vm805 = vcmp.eq.s32.totalorder %v789, %v69
    %v806 = vsel %vm790, 1, 0
    %v807 = vsel %vm791, 1, 0
    %v808 = vsel %vm792, 1, 0
    %v809 = vsel %vm793, 1, 0
    %v810 = vsel %vm794, 1, 0
    %v811 = vsel %vm795, 1, 0
    %v812 = vsel %vm796, 1, 0
    %v813 = vsel %vm797, 1, 0
    %v814 = vsel %vm798, 1, 0
    %v815 = vsel %vm799, 1, 0
    %v816 = vsel %vm800, 1, 0
    %v817 = vsel %vm801, 1, 0
    %v818 = vsel %vm802, 1, 0
    %v819 = vsel %vm803, 1, 0
    %v820 = vsel %vm804, 1, 0
    %v821 = vsel %vm805, 1, 0
    %v822 = vcvt.s32.f32 %v806
    %v823 = vcvt.s32.f32 %v807
    %v824 = vcvt.s32.f32 %v808
    %v825 = vcvt.s32.f32 %v809
    %v826 = vcvt.s32.f32 %v810
    %v827 = vcvt.s32.f32 %v811
    %v828 = vcvt.s32.f32 %v812
    %v829 = vcvt.s32.f32 %v813
    %v830 = vcvt.s32.f32 %v814
    %v831 = vcvt.s32.f32 %v815
    %v832 = vcvt.s32.f32 %v816
    %v833 = vcvt.s32.f32 %v817
    %v834 = vcvt.s32.f32 %v818
    %v835 = vcvt.s32.f32 %v819
    %v836 = vcvt.s32.f32 %v820
    %v837 = vcvt.s32.f32 %v821
    %v838 = vadd.f32 %v726, %v822
    %v839 = vadd.f32 %v727, %v823
    %v840 = vadd.f32 %v728, %v824
    %v841 = vadd.f32 %v729, %v825
    %v842 = vadd.f32 %v730, %v826
    %v843 = vadd.f32 %v731, %v827
    %v844 = vadd.f32 %v732, %v828
    %v845 = vadd.f32 %v733, %v829
    %v846 = vadd.f32 %v734, %v830
    %v847 = vadd.f32 %v735, %v831
    %v848 = vadd.f32 %v736, %v832
    %v849 = vadd.f32 %v737, %v833
    %v850 = vadd.f32 %v738, %v834
    %v851 = vadd.f32 %v739, %v835
    %v852 = vadd.f32 %v740, %v836
    %v853 = vadd.f32 %v741, %v837
    %854 = vset.pattern.permute.xlu0 7
    %855 = vperm.xlu0 %854, %v52
    %v856 = vpop.permute.xlu0 %855
    %857 = vset.pattern.permute.xlu0 7
    %858 = vperm.xlu0 %857, %v53
    %v859 = vpop.permute.xlu0 %858
    %860 = vset.pattern.permute.xlu0 7
    %861 = vperm.xlu0 %860, %v54
    %v862 = vpop.permute.xlu0 %861
    %863 = vset.pattern.permute.xlu0 7
    %864 = vperm.xlu0 %863, %v55
    %v865 = vpop.permute.xlu0 %864
    %866 = vset.pattern.permute.xlu0 7
    %867 = vperm.xlu0 %866, %v56
    %v868 = vpop.permute.xlu0 %867
    %869 = vset.pattern.permute.xlu0 7
    %870 = vperm.xlu0 %869, %v57
    %v871 = vpop.permute.xlu0 %870
    %872 = vset.pattern.permute.xlu0 7
    %873 = vperm.xlu0 %872, %v58
    %v874 = vpop.permute.xlu0 %873
    %875 = vset.pattern.permute.xlu0 7
    %876 = vperm.xlu0 %875, %v59
    %v877 = vpop.permute.xlu0 %876
    %878 = vset.pattern.permute.xlu0 7
    %879 = vperm.xlu0 %878, %v60
    %v880 = vpop.permute.xlu0 %879
    %881 = vset.pattern.permute.xlu0 7
    %882 = vperm.xlu0 %881, %v61
    %v883 = vpop.permute.xlu0 %882
    %884 = vset.pattern.permute.xlu0 7
    %885 = vperm.xlu0 %884, %v62
    %v886 = vpop.permute.xlu0 %885
    %887 = vset.pattern.permute.xlu0 7
    %888 = vperm.xlu0 %887, %v63
    %v889 = vpop.permute.xlu0 %888
    %890 = vset.pattern.permute.xlu0 7
    %891 = vperm.xlu0 %890, %v64
    %v892 = vpop.permute.xlu0 %891
    %893 = vset.pattern.permute.xlu0 7
    %894 = vperm.xlu0 %893, %v65
    %v895 = vpop.permute.xlu0 %894
    %896 = vset.pattern.permute.xlu0 7
    %897 = vperm.xlu0 %896, %v66
    %v898 = vpop.permute.xlu0 %897
    %899 = vset.pattern.permute.xlu0 7
    %900 = vperm.xlu0 %899, %v67
    %v901 = vpop.permute.xlu0 %900
    %vm902 = vcmp.eq.s32.totalorder %v856, %v69
    %vm903 = vcmp.eq.s32.totalorder %v859, %v69
    %vm904 = vcmp.eq.s32.totalorder %v862, %v69
    %vm905 = vcmp.eq.s32.totalorder %v865, %v69
    %vm906 = vcmp.eq.s32.totalorder %v868, %v69
    %vm907 = vcmp.eq.s32.totalorder %v871, %v69
    %vm908 = vcmp.eq.s32.totalorder %v874, %v69
    %vm909 = vcmp.eq.s32.totalorder %v877, %v69
    %vm910 = vcmp.eq.s32.totalorder %v880, %v69
    %vm911 = vcmp.eq.s32.totalorder %v883, %v69
    %vm912 = vcmp.eq.s32.totalorder %v886, %v69
    %vm913 = vcmp.eq.s32.totalorder %v889, %v69
    %vm914 = vcmp.eq.s32.totalorder %v892, %v69
    %vm915 = vcmp.eq.s32.totalorder %v895, %v69
    %vm916 = vcmp.eq.s32.totalorder %v898, %v69
    %vm917 = vcmp.eq.s32.totalorder %v901, %v69
    %v918 = vsel %vm902, 1, 0
    %v919 = vsel %vm903, 1, 0
    %v920 = vsel %vm904, 1, 0
    %v921 = vsel %vm905, 1, 0
    %v922 = vsel %vm906, 1, 0
    %v923 = vsel %vm907, 1, 0
    %v924 = vsel %vm908, 1, 0
    %v925 = vsel %vm909, 1, 0
    %v926 = vsel %vm910, 1, 0
    %v927 = vsel %vm911, 1, 0
    %v928 = vsel %vm912, 1, 0
    %v929 = vsel %vm913, 1, 0
    %v930 = vsel %vm914, 1, 0
    %v931 = vsel %vm915, 1, 0
    %v932 = vsel %vm916, 1, 0
    %v933 = vsel %vm917, 1, 0
    %v934 = vcvt.s32.f32 %v918
    %v935 = vcvt.s32.f32 %v919
    %v936 = vcvt.s32.f32 %v920
    %v937 = vcvt.s32.f32 %v921
    %v938 = vcvt.s32.f32 %v922
    %v939 = vcvt.s32.f32 %v923
    %v940 = vcvt.s32.f32 %v924
    %v941 = vcvt.s32.f32 %v925
    %v942 = vcvt.s32.f32 %v926
    %v943 = vcvt.s32.f32 %v927
    %v944 = vcvt.s32.f32 %v928
    %v945 = vcvt.s32.f32 %v929
    %v946 = vcvt.s32.f32 %v930
    %v947 = vcvt.s32.f32 %v931
    %v948 = vcvt.s32.f32 %v932
    %v949 = vcvt.s32.f32 %v933
    %v950 = vadd.f32 %v838, %v934
    %v951 = vadd.f32 %v839, %v935
    %v952 = vadd.f32 %v840, %v936
    %v953 = vadd.f32 %v841, %v937
    %v954 = vadd.f32 %v842, %v938
    %v955 = vadd.f32 %v843, %v939
    %v956 = vadd.f32 %v844, %v940
    %v957 = vadd.f32 %v845, %v941
    %v958 = vadd.f32 %v846, %v942
    %v959 = vadd.f32 %v847, %v943
    %v960 = vadd.f32 %v848, %v944
    %v961 = vadd.f32 %v849, %v945
    %v962 = vadd.f32 %v850, %v946
    %v963 = vadd.f32 %v851, %v947
    %v964 = vadd.f32 %v852, %v948
    %v965 = vadd.f32 %v853, %v949
    %vm966 = vcmp.eq.s32.totalorder %v69, 0
    %v967 = vsel %vm966, 0.0, %v950
    %v968 = vsel %vm966, 0.0, %v951
    %v969 = vsel %vm966, 0.0, %v952
    %v970 = vsel %vm966, 0.0, %v953
    %v971 = vsel %vm966, 0.0, %v954
    %v972 = vsel %vm966, 0.0, %v955
    %v973 = vsel %vm966, 0.0, %v956
    %v974 = vsel %vm966, 0.0, %v957
    %v975 = vsel %vm966, 0.0, %v958
    %v976 = vsel %vm966, 0.0, %v959
    %v977 = vsel %vm966, 0.0, %v960
    %v978 = vsel %vm966, 0.0, %v961
    %v979 = vsel %vm966, 0.0, %v962
    %v980 = vsel %vm966, 0.0, %v963
    %v981 = vsel %vm966, 0.0, %v964
    %v982 = vsel %vm966, 0.0, %v965
    %983 = vadd.xlane.f32.xlu0 %v967
    %v984 = vpop.xlane.xlu0 %983
    %985 = vadd.xlane.f32.xlu0 %v968
    %v986 = vpop.xlane.xlu0 %985
    %987 = vadd.xlane.f32.xlu0 %v969
    %v988 = vpop.xlane.xlu0 %987
    %989 = vadd.xlane.f32.xlu0 %v970
    %v990 = vpop.xlane.xlu0 %989
    %991 = vadd.xlane.f32.xlu0 %v971
    %v992 = vpop.xlane.xlu0 %991
    %993 = vadd.xlane.f32.xlu0 %v972
    %v994 = vpop.xlane.xlu0 %993
    %995 = vadd.xlane.f32.xlu0 %v973
    %v996 = vpop.xlane.xlu0 %995
    %997 = vadd.xlane.f32.xlu0 %v974
    %v998 = vpop.xlane.xlu0 %997
    %999 = vadd.xlane.f32.xlu0 %v975
    %v1000 = vpop.xlane.xlu0 %999
    %1001 = vadd.xlane.f32.xlu0 %v976
    %v1002 = vpop.xlane.xlu0 %1001
    %1003 = vadd.xlane.f32.xlu0 %v977
    %v1004 = vpop.xlane.xlu0 %1003
    %1005 = vadd.xlane.f32.xlu0 %v978
    %v1006 = vpop.xlane.xlu0 %1005
    %1007 = vadd.xlane.f32.xlu0 %v979
    %v1008 = vpop.xlane.xlu0 %1007
    %1009 = vadd.xlane.f32.xlu0 %v980
    %v1010 = vpop.xlane.xlu0 %1009
    %1011 = vadd.xlane.f32.xlu0 %v981
    %v1012 = vpop.xlane.xlu0 %1011
    %1013 = vadd.xlane.f32.xlu0 %v982
    %v1014 = vpop.xlane.xlu0 %1013
    %v1015 = vmax.f32 %v984, 1.0
    %v1016 = vmax.f32 %v986, 1.0
    %v1017 = vmax.f32 %v988, 1.0
    %v1018 = vmax.f32 %v990, 1.0
    %v1019 = vmax.f32 %v992, 1.0
    %v1020 = vmax.f32 %v994, 1.0
    %v1021 = vmax.f32 %v996, 1.0
    %v1022 = vmax.f32 %v998, 1.0
    %v1023 = vmax.f32 %v1000, 1.0
    %v1024 = vmax.f32 %v1002, 1.0
    %v1025 = vmax.f32 %v1004, 1.0
    %v1026 = vmax.f32 %v1006, 1.0
    %v1027 = vmax.f32 %v1008, 1.0
    %v1028 = vmax.f32 %v1010, 1.0
    %v1029 = vmax.f32 %v1012, 1.0
    %v1030 = vmax.f32 %v1014, 1.0
    %v1031 = vrcp.pop %v1015
    %v1032 = vmul.f32 1.0, %v1031
    %v1033 = vrcp.pop %v1016
    %v1034 = vmul.f32 1.0, %v1033
    %v1035 = vrcp.pop %v1017
    %v1036 = vmul.f32 1.0, %v1035
    %v1037 = vrcp.pop %v1018
    %v1038 = vmul.f32 1.0, %v1037
    %v1039 = vrcp.pop %v1019
    %v1040 = vmul.f32 1.0, %v1039
    %v1041 = vrcp.pop %v1020
    %v1042 = vmul.f32 1.0, %v1041
    %v1043 = vrcp.pop %v1021
    %v1044 = vmul.f32 1.0, %v1043
    %v1045 = vrcp.pop %v1022
    %v1046 = vmul.f32 1.0, %v1045
    %v1047 = vrcp.pop %v1023
    %v1048 = vmul.f32 1.0, %v1047
    %v1049 = vrcp.pop %v1024
    %v1050 = vmul.f32 1.0, %v1049
    %v1051 = vrcp.pop %v1025
    %v1052 = vmul.f32 1.0, %v1051
    %v1053 = vrcp.pop %v1026
    %v1054 = vmul.f32 1.0, %v1053
    %v1055 = vrcp.pop %v1027
    %v1056 = vmul.f32 1.0, %v1055
    %v1057 = vrcp.pop %v1028
    %v1058 = vmul.f32 1.0, %v1057
    %v1059 = vrcp.pop %v1029
    %v1060 = vmul.f32 1.0, %v1059
    %v1061 = vrcp.pop %v1030
    %v1062 = vmul.f32 1.0, %v1061
    %v1063 = vld [vmem:[%s1] sm:$0xff]
    %v1064 = vld [vmem:[%s1 + $0x8] sm:$0xff]
    %v1065 = vld [vmem:[%s1 + $0x10] sm:$0xff]
    %v1066 = vld [vmem:[%s1 + $0x18] sm:$0xff]
    %v1067 = vld [vmem:[%s1 + $0x20] sm:$0xff]
    %v1068 = vld [vmem:[%s1 + $0x28] sm:$0xff]
    %v1069 = vld [vmem:[%s1 + $0x30] sm:$0xff]
    %v1070 = vld [vmem:[%s1 + $0x38] sm:$0xff]
    %v1071 = vld [vmem:[%s1 + $0x40] sm:$0xff]
    %v1072 = vld [vmem:[%s1 + $0x48] sm:$0xff]
    %v1073 = vld [vmem:[%s1 + $0x50] sm:$0xff]
    %v1074 = vld [vmem:[%s1 + $0x58] sm:$0xff]
    %v1075 = vld [vmem:[%s1 + $0x60] sm:$0xff]
    %v1076 = vld [vmem:[%s1 + $0x68] sm:$0xff]
    %v1077 = vld [vmem:[%s1 + $0x70] sm:$0xff]
    %v1078 = vld [vmem:[%s1 + $0x78] sm:$0xff]
    %1079 = vmatprep.subr.mxu0 0.0
    %1080 = vmatpush1.msra.mxu0 %v1063
    %1081 = vmatprep.subr.mxu0 0.0
    %1082 = vmatpush1.msra.mxu0 %v1064
    %1083 = vmatprep.subr.mxu0 0.0
    %1084 = vmatpush1.msra.mxu0 %v1065
    %1085 = vmatprep.subr.mxu0 0.0
    %1086 = vmatpush1.msra.mxu0 %v1066
    %1087 = vmatprep.subr.mxu0 0.0
    %1088 = vmatpush1.msra.mxu0 %v1067
    %1089 = vmatprep.subr.mxu0 0.0
    %1090 = vmatpush1.msra.mxu0 %v1068
    %1091 = vmatprep.subr.mxu0 0.0
    %1092 = vmatpush1.msra.mxu0 %v1069
    %1093 = vmatprep.subr.mxu0 0.0
    %1094 = vmatpush1.msra.mxu0 %v1070
    %1095 = vmatprep.subr.mxu0 0.0
    %1096 = vmatpush1.msra.mxu0 %v1071
    %1097 = vmatprep.subr.mxu0 0.0
    %1098 = vmatpush1.msra.mxu0 %v1072
    %1099 = vmatprep.subr.mxu0 0.0
    %1100 = vmatpush1.msra.mxu0 %v1073
    %1101 = vmatprep.subr.mxu0 0.0
    %1102 = vmatpush1.msra.mxu0 %v1074
    %1103 = vmatprep.subr.mxu0 0.0
    %1104 = vmatpush1.msra.mxu0 %v1075
    %1105 = vmatprep.subr.mxu0 0.0
    %1106 = vmatpush1.msra.mxu0 %v1076
    %1107 = vmatprep.subr.mxu0 0.0
    %1108 = vmatpush1.msra.mxu0 %v1077
    %1109 = vmatprep.subr.mxu0 0.0
    %1110 = vmatpush1.msra.mxu0 %v1078
    %1111 = vmatprep.subr.mxu0 0.0
    %1112 = vmatpush1.msra.mxu0 0.0
    %1113 = vmatprep.subr.mxu0 0.0
    %1114 = vmatpush1.msra.mxu0 0.0
    %1115 = vmatprep.subr.mxu0 0.0
    %1116 = vmatpush1.msra.mxu0 0.0
    %1117 = vmatprep.subr.mxu0 0.0
    %1118 = vmatpush1.msra.mxu0 0.0
    %1119 = vmatprep.subr.mxu0 0.0
    %1120 = vmatpush1.msra.mxu0 0.0
    %1121 = vmatprep.subr.mxu0 0.0
    %1122 = vmatpush1.msra.mxu0 0.0
    %1123 = vmatprep.subr.mxu0 0.0
    %1124 = vmatpush1.msra.mxu0 0.0
    %1125 = vmatprep.subr.mxu0 0.0
    %1126 = vmatpush1.msra.mxu0 0.0
    %1127 = vmatprep.subr.mxu0 0.0
    %1128 = vmatpush1.msra.mxu0 0.0
    %1129 = vmatprep.subr.mxu0 0.0
    %1130 = vmatpush1.msra.mxu0 0.0
    %1131 = vmatprep.subr.mxu0 0.0
    %1132 = vmatpush1.msra.mxu0 0.0
    %1133 = vmatprep.subr.mxu0 0.0
    %1134 = vmatpush1.msra.mxu0 0.0
    %1135 = vmatprep.subr.mxu0 0.0
    %1136 = vmatpush1.msra.mxu0 0.0
    %1137 = vmatprep.subr.mxu0 0.0
    %1138 = vmatpush1.msra.mxu0 0.0
    %1139 = vmatprep.subr.mxu0 0.0
    %1140 = vmatpush1.msra.mxu0 0.0
    %1141 = vmatprep.subr.mxu0 0.0
    %1142 = vmatpush1.msra.mxu0 0.0
    %1143 = vmatprep.mubr.f32.mxu0 0.0
    %1144 = vmatmul.mubr.f32.gmra.mrb[0].mxu0 %v967
    %v1145 = vpop.f32.mrb[0].mxu0
    %v1146 = vadd.f32 0.0, %v1145
    %v1147 = vpop.f32.mrb[0].mxu0
    %1148 = vmatprep.mubr.f32.mxu0 0.0
    %1149 = vmatmul.mubr.f32.gmra.mrb[0].mxu0 %v968
    %v1150 = vpop.f32.mrb[0].mxu0
    %v1151 = vadd.f32 0.0, %v1150
    %v1152 = vpop.f32.mrb[0].mxu0
    %1153 = vmatprep.mubr.f32.mxu0 0.0
    %1154 = vmatmul.mubr.f32.gmra.mrb[0].mxu0 %v969
    %v1155 = vpop.f32.mrb[0].mxu0
    %v1156 = vadd.f32 0.0, %v1155
    %v1157 = vpop.f32.mrb[0].mxu0
    %1158 = vmatprep.mubr.f32.mxu0 0.0
    %1159 = vmatmul.mubr.f32.gmra.mrb[0].mxu0 %v970
    %v1160 = vpop.f32.mrb[0].mxu0
    %v1161 = vadd.f32 0.0, %v1160
    %v1162 = vpop.f32.mrb[0].mxu0
    %1163 = vmatprep.mubr.f32.mxu0 0.0
    %1164 = vmatmul.mubr.f32.gmra.mrb[0].mxu0 %v971
    %v1165 = vpop.f32.mrb[0].mxu0
    %v1166 = vadd.f32 0.0, %v1165
    %v1167 = vpop.f32.mrb[0].mxu0
    %1168 = vmatprep.mubr.f32.mxu0 0.0
    %1169 = vmatmul.mubr.f32.gmra.mrb[0].mxu0 %v972
    %v1170 = vpop.f32.mrb[0].mxu0
    %v1171 = vadd.f32 0.0, %v1170
    %v1172 = vpop.f32.mrb[0].mxu0
    %1173 = vmatprep.mubr.f32.mxu0 0.0
    %1174 = vmatmul.mubr.f32.gmra.mrb[0].mxu0 %v973
    %v1175 = vpop.f32.mrb[0].mxu0
    %v1176 = vadd.f32 0.0, %v1175
    %v1177 = vpop.f32.mrb[0].mxu0
    %1178 = vmatprep.mubr.f32.mxu0 0.0
    %1179 = vmatmul.mubr.f32.gmra.mrb[0].mxu0 %v974
    %v1180 = vpop.f32.mrb[0].mxu0
    %v1181 = vadd.f32 0.0, %v1180
    %v1182 = vpop.f32.mrb[0].mxu0
    %1183 = vmatprep.mubr.f32.mxu0 0.0
    %1184 = vmatmul.mubr.f32.gmra.mrb[0].mxu0 %v975
    %v1185 = vpop.f32.mrb[0].mxu0
    %v1186 = vadd.f32 0.0, %v1185
    %v1187 = vpop.f32.mrb[0].mxu0
    %1188 = vmatprep.mubr.f32.mxu0 0.0
    %1189 = vmatmul.mubr.f32.gmra.mrb[0].mxu0 %v976
    %v1190 = vpop.f32.mrb[0].mxu0
    %v1191 = vadd.f32 0.0, %v1190
    %v1192 = vpop.f32.mrb[0].mxu0
    %1193 = vmatprep.mubr.f32.mxu0 0.0
    %1194 = vmatmul.mubr.f32.gmra.mrb[0].mxu0 %v977
    %v1195 = vpop.f32.mrb[0].mxu0
    %v1196 = vadd.f32 0.0, %v1195
    %v1197 = vpop.f32.mrb[0].mxu0
    %1198 = vmatprep.mubr.f32.mxu0 0.0
    %1199 = vmatmul.mubr.f32.gmra.mrb[0].mxu0 %v978
    %v1200 = vpop.f32.mrb[0].mxu0
    %v1201 = vadd.f32 0.0, %v1200
    %v1202 = vpop.f32.mrb[0].mxu0
    %1203 = vmatprep.mubr.f32.mxu0 0.0
    %1204 = vmatmul.mubr.f32.gmra.mrb[0].mxu0 %v979
    %v1205 = vpop.f32.mrb[0].mxu0
    %v1206 = vadd.f32 0.0, %v1205
    %v1207 = vpop.f32.mrb[0].mxu0
    %1208 = vmatprep.mubr.f32.mxu0 0.0
    %1209 = vmatmul.mubr.f32.gmra.mrb[0].mxu0 %v980
    %v1210 = vpop.f32.mrb[0].mxu0
    %v1211 = vadd.f32 0.0, %v1210
    %v1212 = vpop.f32.mrb[0].mxu0
    %1213 = vmatprep.mubr.f32.mxu0 0.0
    %1214 = vmatmul.mubr.f32.gmra.mrb[0].mxu0 %v981
    %v1215 = vpop.f32.mrb[0].mxu0
    %v1216 = vadd.f32 0.0, %v1215
    %v1217 = vpop.f32.mrb[0].mxu0
    %1218 = vmatprep.mubr.f32.mxu0 0.0
    %1219 = vmatmul.mubr.f32.gmra.mrb[0].mxu0 %v982
    %v1220 = vpop.f32.mrb[0].mxu0
    %v1221 = vadd.f32 0.0, %v1220
    %v1222 = vpop.f32.mrb[0].mxu0
    %1223 = vdwg.mxu0
    %v1224 = vmul.f32 %v1146, %v1032
    %v1225 = vmul.f32 %v1151, %v1034
    %v1226 = vmul.f32 %v1156, %v1036
    %v1227 = vmul.f32 %v1161, %v1038
    %v1228 = vmul.f32 %v1166, %v1040
    %v1229 = vmul.f32 %v1171, %v1042
    %v1230 = vmul.f32 %v1176, %v1044
    %v1231 = vmul.f32 %v1181, %v1046
    %v1232 = vmul.f32 %v1186, %v1048
    %v1233 = vmul.f32 %v1191, %v1050
    %v1234 = vmul.f32 %v1196, %v1052
    %v1235 = vmul.f32 %v1201, %v1054
    %v1236 = vmul.f32 %v1206, %v1056
    %v1237 = vmul.f32 %v1211, %v1058
    %v1238 = vmul.f32 %v1216, %v1060
    %v1239 = vmul.f32 %v1221, %v1062
    %v1240 = vld [vmem:[#allocation2] sm:$0xff]
    %v1241 = vld [vmem:[#allocation2 + $0x8] sm:$0xff]
    %v1242 = vld [vmem:[#allocation2 + $0x10] sm:$0xff]
    %v1243 = vld [vmem:[#allocation2 + $0x18] sm:$0xff]
    %v1244 = vld [vmem:[#allocation2 + $0x20] sm:$0xff]
    %v1245 = vld [vmem:[#allocation2 + $0x28] sm:$0xff]
    %v1246 = vld [vmem:[#allocation2 + $0x30] sm:$0xff]
    %v1247 = vld [vmem:[#allocation2 + $0x38] sm:$0xff]
    %v1248 = vld [vmem:[#allocation2 + $0x40] sm:$0xff]
    %v1249 = vld [vmem:[#allocation2 + $0x48] sm:$0xff]
    %v1250 = vld [vmem:[#allocation2 + $0x50] sm:$0xff]
    %v1251 = vld [vmem:[#allocation2 + $0x58] sm:$0xff]
    %v1252 = vld [vmem:[#allocation2 + $0x60] sm:$0xff]
    %v1253 = vld [vmem:[#allocation2 + $0x68] sm:$0xff]
    %v1254 = vld [vmem:[#allocation2 + $0x70] sm:$0xff]
    %v1255 = vld [vmem:[#allocation2 + $0x78] sm:$0xff]
    %v1256 = vld [vmem:[%s3] sm:$0x1]
    %v1258 = vlaneseq
    %v1259 = vshrl.u32 %v1258, 7
    %v1260 = vsub.s32 0, %v1259
    %v1261 = vrot.slane %v1256, %v1260
    %1263 = vmatprep.subr.mxu0 0.0
    %1264 = vmatpush1.msra.mxu0 %v1240
    %1265 = vmatprep.subr.mxu0 0.0
    %1266 = vmatpush1.msra.mxu0 %v1241
    %1267 = vmatprep.subr.mxu0 0.0
    %1268 = vmatpush1.msra.mxu0 %v1242
    %1269 = vmatprep.subr.mxu0 0.0
    %1270 = vmatpush1.msra.mxu0 %v1243
    %1271 = vmatprep.subr.mxu0 0.0
    %1272 = vmatpush1.msra.mxu0 %v1244
    %1273 = vmatprep.subr.mxu0 0.0
    %1274 = vmatpush1.msra.mxu0 %v1245
    %1275 = vmatprep.subr.mxu0 0.0
    %1276 = vmatpush1.msra.mxu0 %v1246
    %1277 = vmatprep.subr.mxu0 0.0
    %1278 = vmatpush1.msra.mxu0 %v1247
    %1279 = vmatprep.subr.mxu0 0.0
    %1280 = vmatpush1.msra.mxu0 %v1248
    %1281 = vmatprep.subr.mxu0 0.0
    %1282 = vmatpush1.msra.mxu0 %v1249
    %1283 = vmatprep.subr.mxu0 0.0
    %1284 = vmatpush1.msra.mxu0 %v1250
    %1285 = vmatprep.subr.mxu0 0.0
    %1286 = vmatpush1.msra.mxu0 %v1251
    %1287 = vmatprep.subr.mxu0 0.0
    %1288 = vmatpush1.msra.mxu0 %v1252
    %1289 = vmatprep.subr.mxu0 0.0
    %1290 = vmatpush1.msra.mxu0 %v1253
    %1291 = vmatprep.subr.mxu0 0.0
    %1292 = vmatpush1.msra.mxu0 %v1254
    %1293 = vmatprep.subr.mxu0 0.0
    %1294 = vmatpush1.msra.mxu0 %v1255
    %1295 = vmatprep.subr.mxu0 0.0
    %1296 = vmatpush1.msra.mxu0 0.0
    %1297 = vmatprep.subr.mxu0 0.0
    %1298 = vmatpush1.msra.mxu0 0.0
    %1299 = vmatprep.subr.mxu0 0.0
    %1300 = vmatpush1.msra.mxu0 0.0
    %1301 = vmatprep.subr.mxu0 0.0
    %1302 = vmatpush1.msra.mxu0 0.0
    %1303 = vmatprep.subr.mxu0 0.0
    %1304 = vmatpush1.msra.mxu0 0.0
    %1305 = vmatprep.subr.mxu0 0.0
    %1306 = vmatpush1.msra.mxu0 0.0
    %1307 = vmatprep.subr.mxu0 0.0
    %1308 = vmatpush1.msra.mxu0 0.0
    %1309 = vmatprep.subr.mxu0 0.0
    %1310 = vmatpush1.msra.mxu0 0.0
    %1311 = vmatprep.subr.mxu0 0.0
    %1312 = vmatpush1.msra.mxu0 0.0
    %1313 = vmatprep.subr.mxu0 0.0
    %1314 = vmatpush1.msra.mxu0 0.0
    %1315 = vmatprep.subr.mxu0 0.0
    %1316 = vmatpush1.msra.mxu0 0.0
    %1317 = vmatprep.subr.mxu0 0.0
    %1318 = vmatpush1.msra.mxu0 0.0
    %1319 = vmatprep.subr.mxu0 0.0
    %1320 = vmatpush1.msra.mxu0 0.0
    %1321 = vmatprep.subr.mxu0 0.0
    %1322 = vmatpush1.msra.mxu0 0.0
    %1323 = vmatprep.subr.mxu0 0.0
    %1324 = vmatpush1.msra.mxu0 0.0
    %1325 = vmatprep.subr.mxu0 0.0
    %1326 = vmatpush1.msra.mxu0 0.0
    %1327 = vmatprep.mubr.f32.mxu0 0.0
    %1328 = vmatmul.mubr.f32.gmra.mrb[0].mxu0 %v1224
    %v1329 = vpop.f32.mrb[0].mxu0
    %v1330 = vadd.f32 %v1261, %v1329
    %v1331 = vpop.f32.mrb[0].mxu0
    %1332 = vmatprep.mubr.f32.mxu0 0.0
    %1333 = vmatmul.mubr.f32.gmra.mrb[0].mxu0 %v1225
    %v1334 = vpop.f32.mrb[0].mxu0
    %v1335 = vadd.f32 %v1261, %v1334
    %v1336 = vpop.f32.mrb[0].mxu0
    %1337 = vmatprep.mubr.f32.mxu0 0.0
    %1338 = vmatmul.mubr.f32.gmra.mrb[0].mxu0 %v1226
    %v1339 = vpop.f32.mrb[0].mxu0
    %v1340 = vadd.f32 %v1261, %v1339
    %v1341 = vpop.f32.mrb[0].mxu0
    %1342 = vmatprep.mubr.f32.mxu0 0.0
    %1343 = vmatmul.mubr.f32.gmra.mrb[0].mxu0 %v1227
    %v1344 = vpop.f32.mrb[0].mxu0
    %v1345 = vadd.f32 %v1261, %v1344
    %v1346 = vpop.f32.mrb[0].mxu0
    %1347 = vmatprep.mubr.f32.mxu0 0.0
    %1348 = vmatmul.mubr.f32.gmra.mrb[0].mxu0 %v1228
    %v1349 = vpop.f32.mrb[0].mxu0
    %v1350 = vadd.f32 %v1261, %v1349
    %v1351 = vpop.f32.mrb[0].mxu0
    %1352 = vmatprep.mubr.f32.mxu0 0.0
    %1353 = vmatmul.mubr.f32.gmra.mrb[0].mxu0 %v1229
    %v1354 = vpop.f32.mrb[0].mxu0
    %v1355 = vadd.f32 %v1261, %v1354
    %v1356 = vpop.f32.mrb[0].mxu0
    %1357 = vmatprep.mubr.f32.mxu0 0.0
    %1358 = vmatmul.mubr.f32.gmra.mrb[0].mxu0 %v1230
    %v1359 = vpop.f32.mrb[0].mxu0
    %v1360 = vadd.f32 %v1261, %v1359
    %v1361 = vpop.f32.mrb[0].mxu0
    %1362 = vmatprep.mubr.f32.mxu0 0.0
    %1363 = vmatmul.mubr.f32.gmra.mrb[0].mxu0 %v1231
    %v1364 = vpop.f32.mrb[0].mxu0
    %v1365 = vadd.f32 %v1261, %v1364
    %v1366 = vpop.f32.mrb[0].mxu0
    %1367 = vmatprep.mubr.f32.mxu0 0.0
    %1368 = vmatmul.mubr.f32.gmra.mrb[0].mxu0 %v1232
    %v1369 = vpop.f32.mrb[0].mxu0
    %v1370 = vadd.f32 %v1261, %v1369
    %v1371 = vpop.f32.mrb[0].mxu0
    %1372 = vmatprep.mubr.f32.mxu0 0.0
    %1373 = vmatmul.mubr.f32.gmra.mrb[0].mxu0 %v1233
    %v1374 = vpop.f32.mrb[0].mxu0
    %v1375 = vadd.f32 %v1261, %v1374
    %v1376 = vpop.f32.mrb[0].mxu0
    %1377 = vmatprep.mubr.f32.mxu0 0.0
    %1378 = vmatmul.mubr.f32.gmra.mrb[0].mxu0 %v1234
    %v1379 = vpop.f32.mrb[0].mxu0
    %v1380 = vadd.f32 %v1261, %v1379
    %v1381 = vpop.f32.mrb[0].mxu0
    %1382 = vmatprep.mubr.f32.mxu0 0.0
    %1383 = vmatmul.mubr.f32.gmra.mrb[0].mxu0 %v1235
    %v1384 = vpop.f32.mrb[0].mxu0
    %v1385 = vadd.f32 %v1261, %v1384
    %v1386 = vpop.f32.mrb[0].mxu0
    %1387 = vmatprep.mubr.f32.mxu0 0.0
    %1388 = vmatmul.mubr.f32.gmra.mrb[0].mxu0 %v1236
    %v1389 = vpop.f32.mrb[0].mxu0
    %v1390 = vadd.f32 %v1261, %v1389
    %v1391 = vpop.f32.mrb[0].mxu0
    %1392 = vmatprep.mubr.f32.mxu0 0.0
    %1393 = vmatmul.mubr.f32.gmra.mrb[0].mxu0 %v1237
    %v1394 = vpop.f32.mrb[0].mxu0
    %v1395 = vadd.f32 %v1261, %v1394
    %v1396 = vpop.f32.mrb[0].mxu0
    %1397 = vmatprep.mubr.f32.mxu0 0.0
    %1398 = vmatmul.mubr.f32.gmra.mrb[0].mxu0 %v1238
    %v1399 = vpop.f32.mrb[0].mxu0
    %v1400 = vadd.f32 %v1261, %v1399
    %v1401 = vpop.f32.mrb[0].mxu0
    %1402 = vmatprep.mubr.f32.mxu0 0.0
    %1403 = vmatmul.mubr.f32.gmra.mrb[0].mxu0 %v1239
    %v1404 = vpop.f32.mrb[0].mxu0
    %v1405 = vadd.f32 %v1261, %v1404
    %v1406 = vpop.f32.mrb[0].mxu0
    %1407 = vdwg.mxu0
    %v1408 = vmax.f32 %v1330, 0.0
    %v1409 = vmax.f32 %v1335, 0.0
    %v1410 = vmax.f32 %v1340, 0.0
    %v1411 = vmax.f32 %v1345, 0.0
    %v1412 = vmax.f32 %v1350, 0.0
    %v1413 = vmax.f32 %v1355, 0.0
    %v1414 = vmax.f32 %v1360, 0.0
    %v1415 = vmax.f32 %v1365, 0.0
    %v1416 = vmax.f32 %v1370, 0.0
    %v1417 = vmax.f32 %v1375, 0.0
    %v1418 = vmax.f32 %v1380, 0.0
    %v1419 = vmax.f32 %v1385, 0.0
    %v1420 = vmax.f32 %v1390, 0.0
    %v1421 = vmax.f32 %v1395, 0.0
    %v1422 = vmax.f32 %v1400, 0.0
    %v1423 = vmax.f32 %v1405, 0.0
    %v1424 = vld [vmem:[#allocation5] sm:$0xff]
    %v1425 = vld [vmem:[#allocation5 + $0x8] sm:$0xff]
    %v1426 = vld [vmem:[#allocation5 + $0x10] sm:$0xff]
    %v1427 = vld [vmem:[#allocation5 + $0x18] sm:$0xff]
    %v1428 = vld [vmem:[#allocation5 + $0x20] sm:$0xff]
    %v1429 = vld [vmem:[#allocation5 + $0x28] sm:$0xff]
    %v1430 = vld [vmem:[#allocation5 + $0x30] sm:$0xff]
    %v1431 = vld [vmem:[#allocation5 + $0x38] sm:$0xff]
    %v1432 = vld [vmem:[#allocation5 + $0x40] sm:$0xff]
    %v1433 = vld [vmem:[#allocation5 + $0x48] sm:$0xff]
    %v1434 = vld [vmem:[#allocation5 + $0x50] sm:$0xff]
    %v1435 = vld [vmem:[#allocation5 + $0x58] sm:$0xff]
    %v1436 = vld [vmem:[#allocation5 + $0x60] sm:$0xff]
    %v1437 = vld [vmem:[#allocation5 + $0x68] sm:$0xff]
    %v1438 = vld [vmem:[#allocation5 + $0x70] sm:$0xff]
    %v1439 = vld [vmem:[#allocation5 + $0x78] sm:$0xff]
    %v1440 = vld [vmem:[%s5] sm:$0x1]
    %v1442 = vlaneseq
    %v1443 = vshrl.u32 %v1442, 7
    %v1444 = vsub.s32 0, %v1443
    %v1445 = vrot.slane %v1440, %v1444
    %1447 = vmatprep.subr.mxu0 0.0
    %1448 = vmatpush1.msra.mxu0 %v1424
    %1449 = vmatprep.subr.mxu0 0.0
    %1450 = vmatpush1.msra.mxu0 %v1425
    %1451 = vmatprep.subr.mxu0 0.0
    %1452 = vmatpush1.msra.mxu0 %v1426
    %1453 = vmatprep.subr.mxu0 0.0
    %1454 = vmatpush1.msra.mxu0 %v1427
    %1455 = vmatprep.subr.mxu0 0.0
    %1456 = vmatpush1.msra.mxu0 %v1428
    %1457 = vmatprep.subr.mxu0 0.0
    %1458 = vmatpush1.msra.mxu0 %v1429
    %1459 = vmatprep.subr.mxu0 0.0
    %1460 = vmatpush1.msra.mxu0 %v1430
    %1461 = vmatprep.subr.mxu0 0.0
    %1462 = vmatpush1.msra.mxu0 %v1431
    %1463 = vmatprep.subr.mxu0 0.0
    %1464 = vmatpush1.msra.mxu0 %v1432
    %1465 = vmatprep.subr.mxu0 0.0
    %1466 = vmatpush1.msra.mxu0 %v1433
    %1467 = vmatprep.subr.mxu0 0.0
    %1468 = vmatpush1.msra.mxu0 %v1434
    %1469 = vmatprep.subr.mxu0 0.0
    %1470 = vmatpush1.msra.mxu0 %v1435
    %1471 = vmatprep.subr.mxu0 0.0
    %1472 = vmatpush1.msra.mxu0 %v1436
    %1473 = vmatprep.subr.mxu0 0.0
    %1474 = vmatpush1.msra.mxu0 %v1437
    %1475 = vmatprep.subr.mxu0 0.0
    %1476 = vmatpush1.msra.mxu0 %v1438
    %1477 = vmatprep.subr.mxu0 0.0
    %1478 = vmatpush1.msra.mxu0 %v1439
    %1479 = vmatprep.subr.mxu0 0.0
    %1480 = vmatpush1.msra.mxu0 0.0
    %1481 = vmatprep.subr.mxu0 0.0
    %1482 = vmatpush1.msra.mxu0 0.0
    %1483 = vmatprep.subr.mxu0 0.0
    %1484 = vmatpush1.msra.mxu0 0.0
    %1485 = vmatprep.subr.mxu0 0.0
    %1486 = vmatpush1.msra.mxu0 0.0
    %1487 = vmatprep.subr.mxu0 0.0
    %1488 = vmatpush1.msra.mxu0 0.0
    %1489 = vmatprep.subr.mxu0 0.0
    %1490 = vmatpush1.msra.mxu0 0.0
    %1491 = vmatprep.subr.mxu0 0.0
    %1492 = vmatpush1.msra.mxu0 0.0
    %1493 = vmatprep.subr.mxu0 0.0
    %1494 = vmatpush1.msra.mxu0 0.0
    %1495 = vmatprep.subr.mxu0 0.0
    %1496 = vmatpush1.msra.mxu0 0.0
    %1497 = vmatprep.subr.mxu0 0.0
    %1498 = vmatpush1.msra.mxu0 0.0
    %1499 = vmatprep.subr.mxu0 0.0
    %1500 = vmatpush1.msra.mxu0 0.0
    %1501 = vmatprep.subr.mxu0 0.0
    %1502 = vmatpush1.msra.mxu0 0.0
    %1503 = vmatprep.subr.mxu0 0.0
    %1504 = vmatpush1.msra.mxu0 0.0
    %1505 = vmatprep.subr.mxu0 0.0
    %1506 = vmatpush1.msra.mxu0 0.0
    %1507 = vmatprep.subr.mxu0 0.0
    %1508 = vmatpush1.msra.mxu0 0.0
    %1509 = vmatprep.subr.mxu0 0.0
    %1510 = vmatpush1.msra.mxu0 0.0
    %1511 = vmatprep.mubr.f32.mxu0 0.0
    %1512 = vmatmul.mubr.f32.gmra.mrb[0].mxu0 %v1408
    %v1513 = vpop.f32.mrb[0].mxu0
    %v1514 = vadd.f32 %v1445, %v1513
    %v1515 = vpop.f32.mrb[0].mxu0
    %1516 = vmatprep.mubr.f32.mxu0 0.0
    %1517 = vmatmul.mubr.f32.gmra.mrb[0].mxu0 %v1409
    %v1518 = vpop.f32.mrb[0].mxu0
    %v1519 = vadd.f32 %v1445, %v1518
    %v1520 = vpop.f32.mrb[0].mxu0
    %1521 = vmatprep.mubr.f32.mxu0 0.0
    %1522 = vmatmul.mubr.f32.gmra.mrb[0].mxu0 %v1410
    %v1523 = vpop.f32.mrb[0].mxu0
    %v1524 = vadd.f32 %v1445, %v1523
    %v1525 = vpop.f32.mrb[0].mxu0
    %1526 = vmatprep.mubr.f32.mxu0 0.0
    %1527 = vmatmul.mubr.f32.gmra.mrb[0].mxu0 %v1411
    %v1528 = vpop.f32.mrb[0].mxu0
    %v1529 = vadd.f32 %v1445, %v1528
    %v1530 = vpop.f32.mrb[0].mxu0
    %1531 = vmatprep.mubr.f32.mxu0 0.0
    %1532 = vmatmul.mubr.f32.gmra.mrb[0].mxu0 %v1412
    %v1533 = vpop.f32.mrb[0].mxu0
    %v1534 = vadd.f32 %v1445, %v1533
    %v1535 = vpop.f32.mrb[0].mxu0
    %1536 = vmatprep.mubr.f32.mxu0 0.0
    %1537 = vmatmul.mubr.f32.gmra.mrb[0].mxu0 %v1413
    %v1538 = vpop.f32.mrb[0].mxu0
    %v1539 = vadd.f32 %v1445, %v1538
    %v1540 = vpop.f32.mrb[0].mxu0
    %1541 = vmatprep.mubr.f32.mxu0 0.0
    %1542 = vmatmul.mubr.f32.gmra.mrb[0].mxu0 %v1414
    %v1543 = vpop.f32.mrb[0].mxu0
    %v1544 = vadd.f32 %v1445, %v1543
    %v1545 = vpop.f32.mrb[0].mxu0
    %1546 = vmatprep.mubr.f32.mxu0 0.0
    %1547 = vmatmul.mubr.f32.gmra.mrb[0].mxu0 %v1415
    %v1548 = vpop.f32.mrb[0].mxu0
    %v1549 = vadd.f32 %v1445, %v1548
    %v1550 = vpop.f32.mrb[0].mxu0
    %1551 = vmatprep.mubr.f32.mxu0 0.0
    %1552 = vmatmul.mubr.f32.gmra.mrb[0].mxu0 %v1416
    %v1553 = vpop.f32.mrb[0].mxu0
    %v1554 = vadd.f32 %v1445, %v1553
    %v1555 = vpop.f32.mrb[0].mxu0
    %1556 = vmatprep.mubr.f32.mxu0 0.0
    %1557 = vmatmul.mubr.f32.gmra.mrb[0].mxu0 %v1417
    %v1558 = vpop.f32.mrb[0].mxu0
    %v1559 = vadd.f32 %v1445, %v1558
    %v1560 = vpop.f32.mrb[0].mxu0
    %1561 = vmatprep.mubr.f32.mxu0 0.0
    %1562 = vmatmul.mubr.f32.gmra.mrb[0].mxu0 %v1418
    %v1563 = vpop.f32.mrb[0].mxu0
    %v1564 = vadd.f32 %v1445, %v1563
    %v1565 = vpop.f32.mrb[0].mxu0
    %1566 = vmatprep.mubr.f32.mxu0 0.0
    %1567 = vmatmul.mubr.f32.gmra.mrb[0].mxu0 %v1419
    %v1568 = vpop.f32.mrb[0].mxu0
    %v1569 = vadd.f32 %v1445, %v1568
    %v1570 = vpop.f32.mrb[0].mxu0
    %1571 = vmatprep.mubr.f32.mxu0 0.0
    %1572 = vmatmul.mubr.f32.gmra.mrb[0].mxu0 %v1420
    %v1573 = vpop.f32.mrb[0].mxu0
    %v1574 = vadd.f32 %v1445, %v1573
    %v1575 = vpop.f32.mrb[0].mxu0
    %1576 = vmatprep.mubr.f32.mxu0 0.0
    %1577 = vmatmul.mubr.f32.gmra.mrb[0].mxu0 %v1421
    %v1578 = vpop.f32.mrb[0].mxu0
    %v1579 = vadd.f32 %v1445, %v1578
    %v1580 = vpop.f32.mrb[0].mxu0
    %1581 = vmatprep.mubr.f32.mxu0 0.0
    %1582 = vmatmul.mubr.f32.gmra.mrb[0].mxu0 %v1422
    %v1583 = vpop.f32.mrb[0].mxu0
    %v1584 = vadd.f32 %v1445, %v1583
    %v1585 = vpop.f32.mrb[0].mxu0
    %1586 = vmatprep.mubr.f32.mxu0 0.0
    %1587 = vmatmul.mubr.f32.gmra.mrb[0].mxu0 %v1423
    %v1588 = vpop.f32.mrb[0].mxu0
    %v1589 = vadd.f32 %v1445, %v1588
    %v1590 = vpop.f32.mrb[0].mxu0
    %1591 = vdwg.mxu0
    %1592 = vst [vmem:[#allocation7] sm:$0xff] %v1514
    %1593 = vst [vmem:[#allocation7 + $0x8] sm:$0xff] %v1519
    %1594 = vst [vmem:[#allocation7 + $0x10] sm:$0xff] %v1524
    %1595 = vst [vmem:[#allocation7 + $0x18] sm:$0xff] %v1529
    %1596 = vst [vmem:[#allocation7 + $0x20] sm:$0xff] %v1534
    %1597 = vst [vmem:[#allocation7 + $0x28] sm:$0xff] %v1539
    %1598 = vst [vmem:[#allocation7 + $0x30] sm:$0xff] %v1544
    %1599 = vst [vmem:[#allocation7 + $0x38] sm:$0xff] %v1549
    %1600 = vst [vmem:[#allocation7 + $0x40] sm:$0xff] %v1554
    %1601 = vst [vmem:[#allocation7 + $0x48] sm:$0xff] %v1559
    %1602 = vst [vmem:[#allocation7 + $0x50] sm:$0xff] %v1564
    %1603 = vst [vmem:[#allocation7 + $0x58] sm:$0xff] %v1569
    %1604 = vst [vmem:[#allocation7 + $0x60] sm:$0xff] %v1574
    %1605 = vst [vmem:[#allocation7 + $0x68] sm:$0xff] %v1579
    %1606 = vst [vmem:[#allocation7 + $0x70] sm:$0xff] %v1584
    %1607 = vst [vmem:[#allocation7 + $0x78] sm:$0xff] %v1589
    // Predicated region
    $region34: #{tpu_custom_call.1} parent=1 // pred_check
      _
    $region35: #{tpu_custom_call.1} parent=1 // pred_check_branch
      %1609 = sbr.rel (0) target = $region37
    $region36: #{tpu_custom_call.1} parent=1 // pred_region
      %s1611 = ssub.s32 2048, 2048
      %1612 = vsyncadd [#allocation4], %s1611
      %s1613 = sshll.u32 [#allocation7], 4
      %s1614 = int_to_ptr.vmem [resolvable:$true] %s1613
      %1619 = dma.vmem_to_hbm [thread:$0]  %s1614, 2048, %s6, [#allocation4], 128, 128, 8
    $region37: #{tpu_custom_call.1} parent=1 // pred_fallthru
      _
    // Predicated region
    $region38: #{tpu_custom_call.1} parent=1 // pred_check
      _
    $region39: #{tpu_custom_call.1} parent=1 // pred_check_branch
      %1621 = sbr.rel (0) target = $region41
    $region40: #{tpu_custom_call.1} parent=1 // pred_region
      %1622 = dma.done [#allocation4], 2048
    $region41: #{tpu_custom_call.1} parent=1 // pred_fallthru
      _
    %1623 = vsyncpa [#allocation3], 1
    %1624 = vsyncpa [#allocation6], 1
    %1625 = vsyncpa [#allocation4], 1

</llo_original>
